<compile_context>
chip_gen: v7x
topology: tpu7x:2x2x1
jax: 0.10.0
libtpu: 0.0.40
codegen_flags: <defaults>
</compile_context>

<pallas_src>
import functools

import jax
import jax.numpy as jnp
from jax.experimental import pallas as pl
from jax.experimental.pallas import tpu as pltpu


def _layernorm(x, gamma, beta, eps=1e-5):
    # x: (R, C) f32, gamma/beta: (1, C) f32
    mu = jnp.mean(x, axis=-1, keepdims=True)
    xc = x - mu
    var = jnp.mean(xc * xc, axis=-1, keepdims=True)
    inv = jax.lax.rsqrt(var + eps)
    return xc * inv * gamma + beta


def _gelu(x, approximate):
    if approximate:
        # tanh GELU uses the EUP slot (idle while the MLP matmuls own the MXU).
        return jax.nn.gelu(x, approximate=True)
    # nn.GELU default (exact, erf-based) -- matches the PyTorch reference.
    return 0.5 * x * (1.0 + jax.lax.erf(x * (1.0 / jnp.sqrt(2.0).astype(x.dtype))))


def _block_kernel(num_heads, kv_chunk, approx_gelu,
                  x_ref,
                  g1_ref, b1_ref,
                  wqkv_ref,
                  wproj_ref, bproj_ref,
                  g2_ref, b2_ref,
                  wfc1_ref, bfc1_ref,
                  wfc2_ref, bfc2_ref,
                  o_ref,
                  xn_sc, kh_sc, vh_sc):
    _, L, C = x_ref.shape
    TL = o_ref.shape[1]                 # sequence tile handled by this grid step
    NH = num_heads
    D = C // NH
    scale = jnp.float32(D ** (-0.5))

    j = pl.program_id(1)
    row0 = pl.multiple_of(j * TL, TL)

    # ---- per-batch cache build (runs once per batch, on the first sequence tile) ----
    @pl.when(j == 0)
    def _build_cache():
        x_full = x_ref[0].astype(jnp.float32)                    # (L, C)
        xn = _layernorm(x_full, g1_ref[...], b1_ref[...])
        xn_b = xn.astype(jnp.bfloat16)
        xn_sc[...] = xn_b
        w = wqkv_ref[...]                                        # (C, 3C) bf16
        k = jnp.dot(xn_b, w[:, C:2 * C], preferred_element_type=jnp.float32)   # (L, C)
        v = jnp.dot(xn_b, w[:, 2 * C:3 * C], preferred_element_type=jnp.float32)
        kh_sc[...] = k.reshape(L, NH, D).transpose(1, 0, 2).astype(jnp.bfloat16)
        vh_sc[...] = v.reshape(L, NH, D).transpose(1, 0, 2).astype(jnp.bfloat16)

    # ---- per-tile: x = x + Attention(LayerNorm1(x)) ----
    if TL == L:
        x_tile = x_ref[0].astype(jnp.float32)                    # (TL, C)
        xn_tile_b = xn_sc[...]                                    # (TL, C) bf16
    else:
        x_tile = x_ref[0, pl.ds(row0, TL), :].astype(jnp.float32)
        xn_tile_b = xn_sc[pl.ds(row0, TL), :]

    # scale folded into q (TLxC) instead of the (H, TL, L) score tensor
    q = jnp.dot(xn_tile_b, wqkv_ref[:, 0:C],
                preferred_element_type=jnp.float32) * scale
    qh = q.reshape(TL, NH, D).transpose(1, 0, 2).astype(jnp.bfloat16)   # (H, TL, D)

    n_chunks = L // kv_chunk
    if n_chunks == 1:
        s = jnp.einsum('hqd,hkd->hqk', qh, kh_sc[...],
                       preferred_element_type=jnp.float32)               # (H, TL, L)
        s = s - jnp.max(s, axis=-1, keepdims=True)
        p = jnp.exp(s)
        l = jnp.sum(p, axis=-1, keepdims=True)
        acc = jnp.einsum('hqk,hkd->hqd', p.astype(jnp.bfloat16), vh_sc[...],
                         preferred_element_type=jnp.float32)             # (H, TL, D)
    else:
        # Flash-style online softmax: live scores bounded to (H, TL, kv_chunk).
        def body(c, carry):
            m, l, acc = carry
            off = pl.multiple_of(c * kv_chunk, kv_chunk)
            kc = kh_sc[:, pl.ds(off, kv_chunk), :]
            vc = vh_sc[:, pl.ds(off, kv_chunk), :]
            s = jnp.einsum('hqd,hkd->hqk', qh, kc,
                           preferred_element_type=jnp.float32)
            m_new = jnp.maximum(m, jnp.max(s, axis=-1, keepdims=True))
            alpha = jnp.exp(m - m_new)
            p = jnp.exp(s - m_new)
            l = alpha * l + jnp.sum(p, axis=-1, keepdims=True)
            acc = alpha * acc + jnp.einsum('hqk,hkd->hqd',
                                           p.astype(jnp.bfloat16), vc,
                                           preferred_element_type=jnp.float32)
            return m_new, l, acc

        carry0 = (jnp.full((NH, TL, 1), -jnp.inf, jnp.float32),
                  jnp.zeros((NH, TL, 1), jnp.float32),
                  jnp.zeros((NH, TL, D), jnp.float32))
        _, l, acc = jax.lax.fori_loop(0, n_chunks, body, carry0,
                                      unroll=(n_chunks <= 4))

    oh = acc / l                                   # exact normalization, small tensor
    attn_out = oh.transpose(1, 0, 2).reshape(TL, C)
    attn_out = jnp.dot(attn_out.astype(jnp.bfloat16), wproj_ref[...],
                       preferred_element_type=jnp.float32) + bproj_ref[...]
    x1 = x_tile + attn_out

    # ---- x = x + MLP(LayerNorm2(x)) ----
    xn2_b = _layernorm(x1, g2_ref[...], b2_ref[...]).astype(jnp.bfloat16)
    h1 = jnp.dot(xn2_b, wfc1_ref[...],
                 preferred_element_type=jnp.float32) + bfc1_ref[...]      # (TL, 4C)
    h1 = _gelu(h1, approx_gelu)
    h2 = jnp.dot(h1.astype(jnp.bfloat16), wfc2_ref[...],
                 preferred_element_type=jnp.float32) + bfc2_ref[...]      # (TL, C)

    o_ref[0] = (x1 + h2).astype(o_ref.dtype)


def _largest_tile(n, cap):
    if n <= cap:
        return n
    for cand in range(cap, 7, -8):       # multiples of 8, descending
        if n % cand == 0:
            return cand
    return n                              # fallback: whole axis


def _derive_tiling(L):
    """Per-chip sequence tile, K/V chunk and VMEM limit."""
    try:
        info = pltpu.get_tpu_info()
        vmem_cap = int(getattr(info, "vmem_capacity_bytes", 0)) or 64 * 1024 * 1024
    except Exception:
        vmem_cap = 64 * 1024 * 1024                         # conservative (v7x) default
    big_vmem = vmem_cap >= 100 * 1024 * 1024                # v5e / v6e: 128 MiB per TC
    vmem_limit = min(int(vmem_cap * 0.82), vmem_cap - 8 * 1024 * 1024)
    vmem_limit = max(vmem_limit, 32 * 1024 * 1024)
    tl = _largest_tile(L, 512 if big_vmem else 128)
    kc = _largest_tile(L, 512)
    return tl, kc, vmem_limit


def block_forward(x, params, num_heads, approximate_gelu=False):
    """x: (B, L, C) float32.  params: dict (weights pre-transposed, matrices bf16)."""
    B, L, C = x.shape
    H4 = params["wfc1_t"].shape[1]
    D = C // num_heads
    TL, KC, vmem_limit = _derive_tiling(L)
    n_tiles = L // TL

    def const_spec(shape):
        nd = len(shape)
        return pl.BlockSpec(shape, lambda b, j, _nd=nd: (0,) * _nd,
                            pipeline_mode=pl.Buffered(1))

    kernel = functools.partial(_block_kernel, num_heads, KC, approximate_gelu)

    # Advisory cost estimate for the XLA scheduler (K/V now computed once per batch).
    flops = (2 * B * L * C * (3 * C)     # q/k/v projections
             + 4 * B * L * L * C         # q@k^T + p@v over all heads
             + 2 * B * L * C * C         # output projection
             + 4 * B * L * C * H4)       # fc1 + fc2
    transcendentals = B * (num_heads * L * L + L * H4)
    w_bytes = sum(int(v.size) * v.dtype.itemsize for v in params.values())
    bytes_accessed = int(2 * x.size * x.dtype.itemsize + w_bytes)
    cost = pl.CostEstimate(flops=int(flops), transcendentals=int(transcendentals),
                           bytes_accessed=bytes_accessed)

    return pl.pallas_call(
        kernel,
        out_shape=jax.ShapeDtypeStruct((B, L, C), jnp.float32),
        grid=(B, n_tiles),
        in_specs=[
            pl.BlockSpec((1, L, C), lambda b, j: (b, 0, 0),
                         pipeline_mode=pl.Buffered(1)),   # x: constant block across j
            const_spec((1, C)),            # norm1 gamma
            const_spec((1, C)),            # norm1 beta
            const_spec((C, 3 * C)),        # Wqkv^T   (bf16)
            const_spec((C, C)),            # Wproj^T  (bf16)
            const_spec((1, C)),            # proj bias
            const_spec((1, C)),            # norm2 gamma
            const_spec((1, C)),            # norm2 beta
            const_spec((C, H4)),           # Wfc1^T   (bf16)
            const_spec((1, H4)),           # fc1 bias
            const_spec((H4, C)),           # Wfc2^T   (bf16)
            const_spec((1, C)),            # fc2 bias
        ],
        out_specs=pl.BlockSpec((1, TL, C), lambda b, j: (b, j, 0)),
        scratch_shapes=[
            pltpu.VMEM((L, C), jnp.bfloat16),                 # cached LayerNorm1(x)
            pltpu.VMEM((num_heads, L, D), jnp.bfloat16),      # cached K (head-major)
            pltpu.VMEM((num_heads, L, D), jnp.bfloat16),      # cached V (head-major)
        ],
        compiler_params=pltpu.CompilerParams(
            dimension_semantics=("parallel", "arbitrary"),
            vmem_limit_bytes=int(vmem_limit)),
        cost_estimate=cost,
    )(x,
      params["g1"], params["b1"],
      params["wqkv_t"],
      params["wproj_t"], params["bproj"],
      params["g2"], params["b2"],
      params["wfc1_t"], params["bfc1"],
      params["wfc2_t"], params["bfc2"])


def block_reference(x, params, num_heads):
    """Pure-JAX f32 reference mirroring the PyTorch Block ('math' attention mode)."""
    B, L, C = x.shape
    D = C // num_heads
    scale = D ** (-0.5)

    wqkv = params["wqkv_t"].astype(jnp.float32)
    wproj = params["wproj_t"].astype(jnp.float32)
    wfc1 = params["wfc1_t"].astype(jnp.float32)
    wfc2 = params["wfc2_t"].astype(jnp.float32)

    def ln(v, g, b, eps=1e-5):
        mu = jnp.mean(v, axis=-1, keepdims=True)
        var = jnp.mean((v - mu) ** 2, axis=-1, keepdims=True)
        return (v - mu) / jnp.sqrt(var + eps) * g + b

    xn = ln(x, params["g1"][0], params["b1"][0])
    qkv = xn @ wqkv                                              # (B, L, 3C)
    qkv = qkv.reshape(B, L, 3, num_heads, D).transpose(2, 0, 3, 1, 4)
    q, k, v = qkv[0], qkv[1], qkv[2]                             # (B, H, L, D)
    attn = jnp.einsum("bhld,bhmd->bhlm", q, k) * scale
    attn = jax.nn.softmax(attn, axis=-1)
    o = jnp.einsum("bhlm,bhmd->bhld", attn, v)
    o = o.transpose(0, 2, 1, 3).reshape(B, L, C)
    o = o @ wproj + params["bproj"][0]
    x = x + o

    xn2 = ln(x, params["g2"][0], params["b2"][0])
    h = xn2 @ wfc1 + params["bfc1"][0]
    h = jax.nn.gelu(h, approximate=False)
    h = h @ wfc2 + params["bfc2"][0]
    return x + h


def make_params(key, dim, mlp_ratio=4.0):
    hidden = int(dim * mlp_ratio)
    ks = jax.random.split(key, 4)
    s = 0.02
    return {
        "g1": jnp.ones((1, dim), jnp.float32),
        "b1": jnp.zeros((1, dim), jnp.float32),
        "wqkv_t": (s * jax.random.normal(ks[0], (dim, 3 * dim), jnp.float32)).astype(jnp.bfloat16),
        "wproj_t": (s * jax.random.normal(ks[1], (dim, dim), jnp.float32)).astype(jnp.bfloat16),
        "bproj": jnp.zeros((1, dim), jnp.float32),
        "g2": jnp.ones((1, dim), jnp.float32),
        "b2": jnp.zeros((1, dim), jnp.float32),
        "wfc1_t": (s * jax.random.normal(ks[2], (dim, hidden), jnp.float32)).astype(jnp.bfloat16),
        "bfc1": 0.01 * jnp.ones((1, hidden), jnp.float32),
        "wfc2_t": (s * jax.random.normal(ks[3], (hidden, dim), jnp.float32)).astype(jnp.bfloat16),
        "bfc2": 0.01 * jnp.ones((1, dim), jnp.float32),
    }


if __name__ == "__main__":
    B, L, C = 2, 8, 32
    num_heads = 4

    key = jax.random.PRNGKey(0)
    kx, kp = jax.random.split(key)
    x = jax.random.normal(kx, (B, L, C), jnp.float32)
    params = make_params(kp, C)

    out = block_forward(x, params, num_heads)
    out = jax.block_until_ready(out)

    ref = block_reference(x, params, num_heads)
    assert out.shape == (B, L, C)
    # bf16 MXU operands => slightly looser tolerance than pure f32.
    assert jnp.allclose(out, ref, atol=2e-2, rtol=2e-2), "mismatch vs reference"

    print("KERNEL_OK")
</pallas_src>

<mosaic_0001>
module attributes {stable_mosaic.version = 11 : i64} {
  func.func @_block_kernel(%arg0: i32, %arg1: i32, %arg2: memref<1x8x32xf32, #tpu.memory_space<vmem>>, %arg3: memref<1x32xf32, #tpu.memory_space<vmem>>, %arg4: memref<1x32xf32, #tpu.memory_space<vmem>>, %arg5: memref<32x96xbf16, #tpu.memory_space<vmem>>, %arg6: memref<32x32xbf16, #tpu.memory_space<vmem>>, %arg7: memref<1x32xf32, #tpu.memory_space<vmem>>, %arg8: memref<1x32xf32, #tpu.memory_space<vmem>>, %arg9: memref<1x32xf32, #tpu.memory_space<vmem>>, %arg10: memref<32x128xbf16, #tpu.memory_space<vmem>>, %arg11: memref<1x128xf32, #tpu.memory_space<vmem>>, %arg12: memref<128x32xbf16, #tpu.memory_space<vmem>>, %arg13: memref<1x32xf32, #tpu.memory_space<vmem>>, %arg14: memref<1x8x32xf32, #tpu.memory_space<vmem>>, %arg15: memref<8x32xbf16, #tpu.memory_space<vmem>>, %arg16: memref<4x8x8xbf16, #tpu.memory_space<vmem>>, %arg17: memref<4x8x8xbf16, #tpu.memory_space<vmem>>) attributes {dimension_semantics = [#tpu.dimension_semantics<parallel>, #tpu.dimension_semantics<arbitrary>], iteration_bounds = array<i64: 2, 1>, scalar_prefetch = 0 : i64, scratch_operands = 3 : i64, tpu.core_type = #tpu.core_type<tc>, window_params = [{pipeline_mode = #tpu.pipeline_mode<synchronous>, transform_indices = @transform_0, window_bounds = array<i64: 1, 8, 32>}, {pipeline_mode = #tpu.pipeline_mode<synchronous>, transform_indices = @transform_1, window_bounds = array<i64: 1, 32>}, {pipeline_mode = #tpu.pipeline_mode<synchronous>, transform_indices = @transform_2, window_bounds = array<i64: 1, 32>}, {pipeline_mode = #tpu.pipeline_mode<synchronous>, transform_indices = @transform_3, window_bounds = array<i64: 32, 96>}, {pipeline_mode = #tpu.pipeline_mode<synchronous>, transform_indices = @transform_4, window_bounds = array<i64: 32, 32>}, {pipeline_mode = #tpu.pipeline_mode<synchronous>, transform_indices = @transform_5, window_bounds = array<i64: 1, 32>}, {pipeline_mode = #tpu.pipeline_mode<synchronous>, transform_indices = @transform_6, window_bounds = array<i64: 1, 32>}, {pipeline_mode = #tpu.pipeline_mode<synchronous>, transform_indices = @transform_7, window_bounds = array<i64: 1, 32>}, {pipeline_mode = #tpu.pipeline_mode<synchronous>, transform_indices = @transform_8, window_bounds = array<i64: 32, 128>}, {pipeline_mode = #tpu.pipeline_mode<synchronous>, transform_indices = @transform_9, window_bounds = array<i64: 1, 128>}, {pipeline_mode = #tpu.pipeline_mode<synchronous>, transform_indices = @transform_10, window_bounds = array<i64: 128, 32>}, {pipeline_mode = #tpu.pipeline_mode<synchronous>, transform_indices = @transform_11, window_bounds = array<i64: 1, 32>}, {transform_indices = @transform_12, window_bounds = array<i64: 1, 8, 32>}]} {
    %c0_i32 = arith.constant 0 : i32
    %0 = arith.cmpi eq, %arg1, %c0_i32 : i32
    %1 = arith.extui %0 : i1 to i32
    %c0_i32_0 = arith.constant 0 : i32
    %2 = arith.cmpi ne, %1, %c0_i32_0 : i32
    scf.if %2 {
      %c0_49 = arith.constant 0 : index
      %c0_50 = arith.constant 0 : index
      %c0_51 = arith.constant 0 : index
      %84 = vector.load %arg2[%c0_49, %c0_50, %c0_51] : memref<1x8x32xf32, #tpu.memory_space<vmem>>, vector<1x8x32xf32>
      %85 = vector.shape_cast %84 : vector<1x8x32xf32> to vector<8x32xf32>
      %c0_52 = arith.constant 0 : index
      %c0_53 = arith.constant 0 : index
      %86 = vector.load %arg3[%c0_52, %c0_53] : memref<1x32xf32, #tpu.memory_space<vmem>>, vector<1x32xf32>
      %c0_54 = arith.constant 0 : index
      %c0_55 = arith.constant 0 : index
      %87 = vector.load %arg4[%c0_54, %c0_55] : memref<1x32xf32, #tpu.memory_space<vmem>>, vector<1x32xf32>
      %cst_56 = arith.constant dense<0.000000e+00> : vector<8xf32>
      %88 = vector.multi_reduction <add>, %85, %cst_56 [1] : vector<8x32xf32> to vector<8xf32>
      %89 = vector.shape_cast %88 : vector<8xf32> to vector<8x1xf32>
      %cst_57 = arith.constant 3.200000e+01 : f32
      %90 = vector.broadcast %cst_57 : f32 to vector<8x1xf32>
      %91 = arith.divf %89, %90 : vector<8x1xf32>
      %92 = vector.broadcast %91 : vector<8x1xf32> to vector<8x32xf32>
      %93 = arith.subf %85, %92 : vector<8x32xf32>
      %94 = arith.mulf %93, %93 : vector<8x32xf32>
      %cst_58 = arith.constant dense<0.000000e+00> : vector<8xf32>
      %95 = vector.multi_reduction <add>, %94, %cst_58 [1] : vector<8x32xf32> to vector<8xf32>
      %96 = vector.shape_cast %95 : vector<8xf32> to vector<8x1xf32>
      %cst_59 = arith.constant 3.200000e+01 : f32
      %97 = vector.broadcast %cst_59 : f32 to vector<8x1xf32>
      %98 = arith.divf %96, %97 : vector<8x1xf32>
      %cst_60 = arith.constant 9.99999974E-6 : f32
      %99 = vector.broadcast %cst_60 : f32 to vector<8x1xf32>
      %100 = arith.addf %98, %99 : vector<8x1xf32>
      %101 = math.rsqrt %100 : vector<8x1xf32>
      %102 = vector.broadcast %101 : vector<8x1xf32> to vector<8x32xf32>
      %103 = arith.mulf %93, %102 : vector<8x32xf32>
      %104 = vector.broadcast %86 : vector<1x32xf32> to vector<8x32xf32>
      %105 = arith.mulf %103, %104 : vector<8x32xf32>
      %106 = vector.broadcast %87 : vector<1x32xf32> to vector<8x32xf32>
      %107 = arith.addf %105, %106 : vector<8x32xf32>
      %108 = arith.truncf %107 : vector<8x32xf32> to vector<8x32xbf16>
      %c0_61 = arith.constant 0 : index
      %c0_62 = arith.constant 0 : index
      %109 = vector.load %arg15[%c0_61, %c0_62] : memref<8x32xbf16, #tpu.memory_space<vmem>>, vector<8x32xbf16>
      tpu.vector_store %arg15[%c0_61, %c0_62], %108 {strides = array<i32>} : memref<8x32xbf16, #tpu.memory_space<vmem>>, vector<8x32xbf16>,
      %c0_63 = arith.constant 0 : index
      %c0_64 = arith.constant 0 : index
      %110 = vector.load %arg5[%c0_63, %c0_64] : memref<32x96xbf16, #tpu.memory_space<vmem>>, vector<32x96xbf16>
      %111 = vector.extract_strided_slice %110 {offsets = [0, 32], sizes = [32, 32], strides = [1, 1]} : vector<32x96xbf16> to vector<32x32xbf16>
      %cst_65 = arith.constant dense<0.000000e+00> : vector<8x32xf32>
      %112 = tpu.matmul %108, %111, %cst_65 {dimension_numbers = #tpu.dot_dimension_numbers<[1], [0], [0], [1], [0, 0, 1, 1], [], []>} : vector<8x32xbf16>, vector<32x32xbf16>, vector<8x32xf32> -> vector<8x32xf32>
      %113 = vector.extract_strided_slice %110 {offsets = [0, 64], sizes = [32, 32], strides = [1, 1]} : vector<32x96xbf16> to vector<32x32xbf16>
      %cst_66 = arith.constant dense<0.000000e+00> : vector<8x32xf32>
      %114 = tpu.matmul %108, %113, %cst_66 {dimension_numbers = #tpu.dot_dimension_numbers<[1], [0], [0], [1], [0, 0, 1, 1], [], []>} : vector<8x32xbf16>, vector<32x32xbf16>, vector<8x32xf32> -> vector<8x32xf32>
      %115 = vector.shape_cast %112 : vector<8x32xf32> to vector<8x4x8xf32>
      %116 = tpu.transpose %115, [1, 0, 2] : vector<8x4x8xf32> -> vector<4x8x8xf32>
      %117 = arith.truncf %116 : vector<4x8x8xf32> to vector<4x8x8xbf16>
      %c0_67 = arith.constant 0 : index
      %c0_68 = arith.constant 0 : index
      %c0_69 = arith.constant 0 : index
      %118 = vector.load %arg16[%c0_67, %c0_68, %c0_69] : memref<4x8x8xbf16, #tpu.memory_space<vmem>>, vector<4x8x8xbf16>
      tpu.vector_store %arg16[%c0_67, %c0_68, %c0_69], %117 {strides = array<i32>} : memref<4x8x8xbf16, #tpu.memory_space<vmem>>, vector<4x8x8xbf16>,
      %119 = vector.shape_cast %114 : vector<8x32xf32> to vector<8x4x8xf32>
      %120 = tpu.transpose %119, [1, 0, 2] : vector<8x4x8xf32> -> vector<4x8x8xf32>
      %121 = arith.truncf %120 : vector<4x8x8xf32> to vector<4x8x8xbf16>
      %c0_70 = arith.constant 0 : index
      %c0_71 = arith.constant 0 : index
      %c0_72 = arith.constant 0 : index
      %122 = vector.load %arg17[%c0_70, %c0_71, %c0_72] : memref<4x8x8xbf16, #tpu.memory_space<vmem>>, vector<4x8x8xbf16>
      tpu.vector_store %arg17[%c0_70, %c0_71, %c0_72], %121 {strides = array<i32>} : memref<4x8x8xbf16, #tpu.memory_space<vmem>>, vector<4x8x8xbf16>,
    } else {
    }
    %c0 = arith.constant 0 : index
    %c0_1 = arith.constant 0 : index
    %c0_2 = arith.constant 0 : index
    %3 = vector.load %arg2[%c0, %c0_1, %c0_2] : memref<1x8x32xf32, #tpu.memory_space<vmem>>, vector<1x8x32xf32>
    %4 = vector.shape_cast %3 : vector<1x8x32xf32> to vector<8x32xf32>
    %c0_3 = arith.constant 0 : index
    %c0_4 = arith.constant 0 : index
    %5 = vector.load %arg15[%c0_3, %c0_4] : memref<8x32xbf16, #tpu.memory_space<vmem>>, vector<8x32xbf16>
    %c0_5 = arith.constant 0 : index
    %c0_6 = arith.constant 0 : index
    %6 = vector.load %arg5[%c0_5, %c0_6] : memref<32x96xbf16, #tpu.memory_space<vmem>>, vector<32x32xbf16>
    %cst = arith.constant dense<0.000000e+00> : vector<8x32xf32>
    %7 = tpu.matmul %5, %6, %cst {dimension_numbers = #tpu.dot_dimension_numbers<[1], [0], [0], [1], [0, 0, 1, 1], [], []>} : vector<8x32xbf16>, vector<32x32xbf16>, vector<8x32xf32> -> vector<8x32xf32>
    %cst_7 = arith.constant 0.353553385 : f32
    %8 = vector.broadcast %cst_7 : f32 to vector<8x32xf32>
    %9 = arith.mulf %7, %8 : vector<8x32xf32>
    %10 = vector.shape_cast %9 : vector<8x32xf32> to vector<8x4x8xf32>
    %11 = tpu.transpose %10, [1, 0, 2] : vector<8x4x8xf32> -> vector<4x8x8xf32>
    %12 = arith.truncf %11 : vector<4x8x8xf32> to vector<4x8x8xbf16>
    %c0_8 = arith.constant 0 : index
    %c0_9 = arith.constant 0 : index
    %c0_10 = arith.constant 0 : index
    %13 = vector.load %arg16[%c0_8, %c0_9, %c0_10] : memref<4x8x8xbf16, #tpu.memory_space<vmem>>, vector<4x8x8xbf16>
    "tpu.trace_start"() <{level = 10 : i32, message = "hqd,hkd->hqk"}> : () -> ()
    %cst_11 = arith.constant dense<0.000000e+00> : vector<4x8x8xf32>
    %14 = tpu.matmul %12, %13, %cst_11 {dimension_numbers = #tpu.dot_dimension_numbers<[2], [2], [1], [1], [0, 0, 0, 1, 1, 1], [0], [0]>} : vector<4x8x8xbf16>, vector<4x8x8xbf16>, vector<4x8x8xf32> -> vector<4x8x8xf32>
    "tpu.trace_stop"() : () -> ()
    %cst_12 = arith.constant dense<0xFF800000> : vector<4x8xf32>
    %15 = vector.multi_reduction <maximumf>, %14, %cst_12 [2] : vector<4x8x8xf32> to vector<4x8xf32>
    %16 = vector.shape_cast %15 : vector<4x8xf32> to vector<4x8x1xf32>
    %17 = vector.broadcast %16 : vector<4x8x1xf32> to vector<4x8x8xf32>
    %18 = arith.subf %14, %17 : vector<4x8x8xf32>
    %19 = math.exp %18 : vector<4x8x8xf32>
    %cst_13 = arith.constant dense<0.000000e+00> : vector<4x8xf32>
    %20 = vector.multi_reduction <add>, %19, %cst_13 [2] : vector<4x8x8xf32> to vector<4x8xf32>
    %21 = vector.shape_cast %20 : vector<4x8xf32> to vector<4x8x1xf32>
    %22 = arith.truncf %19 : vector<4x8x8xf32> to vector<4x8x8xbf16>
    %c0_14 = arith.constant 0 : index
    %c0_15 = arith.constant 0 : index
    %c0_16 = arith.constant 0 : index
    %23 = vector.load %arg17[%c0_14, %c0_15, %c0_16] : memref<4x8x8xbf16, #tpu.memory_space<vmem>>, vector<4x8x8xbf16>
    "tpu.trace_start"() <{level = 10 : i32, message = "hqk,hkd->hqd"}> : () -> ()
    %cst_17 = arith.constant dense<0.000000e+00> : vector<4x8x8xf32>
    %24 = tpu.matmul %22, %23, %cst_17 {dimension_numbers = #tpu.dot_dimension_numbers<[2], [1], [1], [2], [0, 0, 0, 1, 1, 2], [0], [0]>} : vector<4x8x8xbf16>, vector<4x8x8xbf16>, vector<4x8x8xf32> -> vector<4x8x8xf32>
    "tpu.trace_stop"() : () -> ()
    %25 = vector.broadcast %21 : vector<4x8x1xf32> to vector<4x8x8xf32>
    %26 = arith.divf %24, %25 : vector<4x8x8xf32>
    %27 = tpu.transpose %26, [1, 0, 2] : vector<4x8x8xf32> -> vector<8x4x8xf32>
    %28 = vector.shape_cast %27 : vector<8x4x8xf32> to vector<8x32xf32>
    %29 = arith.truncf %28 : vector<8x32xf32> to vector<8x32xbf16>
    %c0_18 = arith.constant 0 : index
    %c0_19 = arith.constant 0 : index
    %30 = vector.load %arg6[%c0_18, %c0_19] : memref<32x32xbf16, #tpu.memory_space<vmem>>, vector<32x32xbf16>
    %cst_20 = arith.constant dense<0.000000e+00> : vector<8x32xf32>
    %31 = tpu.matmul %29, %30, %cst_20 {dimension_numbers = #tpu.dot_dimension_numbers<[1], [0], [0], [1], [0, 0, 1, 1], [], []>} : vector<8x32xbf16>, vector<32x32xbf16>, vector<8x32xf32> -> vector<8x32xf32>
    %c0_21 = arith.constant 0 : index
    %c0_22 = arith.constant 0 : index
    %32 = vector.load %arg7[%c0_21, %c0_22] : memref<1x32xf32, #tpu.memory_space<vmem>>, vector<1x32xf32>
    %33 = vector.broadcast %32 : vector<1x32xf32> to vector<8x32xf32>
    %34 = arith.addf %31, %33 : vector<8x32xf32>
    %35 = arith.addf %4, %34 : vector<8x32xf32>
    %c0_23 = arith.constant 0 : index
    %c0_24 = arith.constant 0 : index
    %36 = vector.load %arg8[%c0_23, %c0_24] : memref<1x32xf32, #tpu.memory_space<vmem>>, vector<1x32xf32>
    %c0_25 = arith.constant 0 : index
    %c0_26 = arith.constant 0 : index
    %37 = vector.load %arg9[%c0_25, %c0_26] : memref<1x32xf32, #tpu.memory_space<vmem>>, vector<1x32xf32>
    %cst_27 = arith.constant dense<0.000000e+00> : vector<8xf32>
    %38 = vector.multi_reduction <add>, %35, %cst_27 [1] : vector<8x32xf32> to vector<8xf32>
    %39 = vector.shape_cast %38 : vector<8xf32> to vector<8x1xf32>
    %cst_28 = arith.constant 3.200000e+01 : f32
    %40 = vector.broadcast %cst_28 : f32 to vector<8x1xf32>
    %41 = arith.divf %39, %40 : vector<8x1xf32>
    %42 = vector.broadcast %41 : vector<8x1xf32> to vector<8x32xf32>
    %43 = arith.subf %35, %42 : vector<8x32xf32>
    %44 = arith.mulf %43, %43 : vector<8x32xf32>
    %cst_29 = arith.constant dense<0.000000e+00> : vector<8xf32>
    %45 = vector.multi_reduction <add>, %44, %cst_29 [1] : vector<8x32xf32> to vector<8xf32>
    %46 = vector.shape_cast %45 : vector<8xf32> to vector<8x1xf32>
    %cst_30 = arith.constant 3.200000e+01 : f32
    %47 = vector.broadcast %cst_30 : f32 to vector<8x1xf32>
    %48 = arith.divf %46, %47 : vector<8x1xf32>
    %cst_31 = arith.constant 9.99999974E-6 : f32
    %49 = vector.broadcast %cst_31 : f32 to vector<8x1xf32>
    %50 = arith.addf %48, %49 : vector<8x1xf32>
    %51 = math.rsqrt %50 : vector<8x1xf32>
    %52 = vector.broadcast %51 : vector<8x1xf32> to vector<8x32xf32>
    %53 = arith.mulf %43, %52 : vector<8x32xf32>
    %54 = vector.broadcast %36 : vector<1x32xf32> to vector<8x32xf32>
    %55 = arith.mulf %53, %54 : vector<8x32xf32>
    %56 = vector.broadcast %37 : vector<1x32xf32> to vector<8x32xf32>
    %57 = arith.addf %55, %56 : vector<8x32xf32>
    %58 = arith.truncf %57 : vector<8x32xf32> to vector<8x32xbf16>
    %c0_32 = arith.constant 0 : index
    %c0_33 = arith.constant 0 : index
    %59 = vector.load %arg10[%c0_32, %c0_33] : memref<32x128xbf16, #tpu.memory_space<vmem>>, vector<32x128xbf16>
    %cst_34 = arith.constant dense<0.000000e+00> : vector<8x128xf32>
    %60 = tpu.matmul %58, %59, %cst_34 {dimension_numbers = #tpu.dot_dimension_numbers<[1], [0], [0], [1], [0, 0, 1, 1], [], []>} : vector<8x32xbf16>, vector<32x128xbf16>, vector<8x128xf32> -> vector<8x128xf32>
    %c0_35 = arith.constant 0 : index
    %c0_36 = arith.constant 0 : index
    %61 = vector.load %arg11[%c0_35, %c0_36] : memref<1x128xf32, #tpu.memory_space<vmem>>, vector<1x128xf32>
    %62 = vector.broadcast %61 : vector<1x128xf32> to vector<8x128xf32>
    %63 = arith.addf %60, %62 : vector<8x128xf32>
    %cst_37 = arith.constant 5.000000e-01 : f32
    %64 = vector.broadcast %cst_37 : f32 to vector<8x128xf32>
    %65 = arith.mulf %64, %63 : vector<8x128xf32>
    %cst_38 = arith.constant 2.000000e+00 : f32
    %66 = math.sqrt %cst_38 : f32
    %cst_39 = arith.constant 1.000000e+00 : f32
    %67 = arith.divf %cst_39, %66 : f32
    %68 = vector.broadcast %67 : f32 to vector<8x128xf32>
    %69 = arith.mulf %63, %68 : vector<8x128xf32>
    %70 = math.erf %69 : vector<8x128xf32>
    %cst_40 = arith.constant 1.000000e+00 : f32
    %71 = vector.broadcast %cst_40 : f32 to vector<8x128xf32>
    %72 = arith.addf %71, %70 : vector<8x128xf32>
    %73 = arith.mulf %65, %72 : vector<8x128xf32>
    %74 = arith.truncf %73 : vector<8x128xf32> to vector<8x128xbf16>
    %c0_41 = arith.constant 0 : index
    %c0_42 = arith.constant 0 : index
    %75 = vector.load %arg12[%c0_41, %c0_42] : memref<128x32xbf16, #tpu.memory_space<vmem>>, vector<128x32xbf16>
    %cst_43 = arith.constant dense<0.000000e+00> : vector<8x32xf32>
    %76 = tpu.matmul %74, %75, %cst_43 {dimension_numbers = #tpu.dot_dimension_numbers<[1], [0], [0], [1], [0, 0, 1, 1], [], []>} : vector<8x128xbf16>, vector<128x32xbf16>, vector<8x32xf32> -> vector<8x32xf32>
    %c0_44 = arith.constant 0 : index
    %c0_45 = arith.constant 0 : index
    %77 = vector.load %arg13[%c0_44, %c0_45] : memref<1x32xf32, #tpu.memory_space<vmem>>, vector<1x32xf32>
    %78 = vector.broadcast %77 : vector<1x32xf32> to vector<8x32xf32>
    %79 = arith.addf %76, %78 : vector<8x32xf32>
    %80 = arith.addf %35, %79 : vector<8x32xf32>
    %c0_46 = arith.constant 0 : index
    %c0_47 = arith.constant 0 : index
    %c0_48 = arith.constant 0 : index
    %81 = vector.load %arg14[%c0_46, %c0_47, %c0_48] : memref<1x8x32xf32, #tpu.memory_space<vmem>>, vector<1x8x32xf32>
    %82 = vector.shape_cast %81 : vector<1x8x32xf32> to vector<8x32xf32>
    %83 = vector.shape_cast %80 : vector<8x32xf32> to vector<1x8x32xf32>
    tpu.vector_store %arg14[%c0_46, %c0_47, %c0_48], %83 {strides = array<i32>} : memref<1x8x32xf32, #tpu.memory_space<vmem>>, vector<1x8x32xf32>,
    return
  }
  func.func @transform_0(%arg0: i32, %arg1: i32) -> (i32, i32, i32) {
    %c0_i32 = arith.constant 0 : i32
    %c0_i32_0 = arith.constant 0 : i32
    %c0_i32_1 = arith.constant 0 : i32
    return %arg0, %c0_i32, %c0_i32_0 : i32, i32, i32
  }
  func.func @transform_1(%arg0: i32, %arg1: i32) -> (i32, i32) {
    %c0_i32 = arith.constant 0 : i32
    %c0_i32_0 = arith.constant 0 : i32
    %c0_i32_1 = arith.constant 0 : i32
    return %c0_i32, %c0_i32_0 : i32, i32
  }
  func.func @transform_2(%arg0: i32, %arg1: i32) -> (i32, i32) {
    %c0_i32 = arith.constant 0 : i32
    %c0_i32_0 = arith.constant 0 : i32
    %c0_i32_1 = arith.constant 0 : i32
    return %c0_i32, %c0_i32_0 : i32, i32
  }
  func.func @transform_3(%arg0: i32, %arg1: i32) -> (i32, i32) {
    %c0_i32 = arith.constant 0 : i32
    %c0_i32_0 = arith.constant 0 : i32
    %c0_i32_1 = arith.constant 0 : i32
    return %c0_i32, %c0_i32_0 : i32, i32
  }
  func.func @transform_4(%arg0: i32, %arg1: i32) -> (i32, i32) {
    %c0_i32 = arith.constant 0 : i32
    %c0_i32_0 = arith.constant 0 : i32
    %c0_i32_1 = arith.constant 0 : i32
    return %c0_i32, %c0_i32_0 : i32, i32
  }
  func.func @transform_5(%arg0: i32, %arg1: i32) -> (i32, i32) {
    %c0_i32 = arith.constant 0 : i32
    %c0_i32_0 = arith.constant 0 : i32
    %c0_i32_1 = arith.constant 0 : i32
    return %c0_i32, %c0_i32_0 : i32, i32
  }
  func.func @transform_6(%arg0: i32, %arg1: i32) -> (i32, i32) {
    %c0_i32 = arith.constant 0 : i32
    %c0_i32_0 = arith.constant 0 : i32
    %c0_i32_1 = arith.constant 0 : i32
    return %c0_i32, %c0_i32_0 : i32, i32
  }
  func.func @transform_7(%arg0: i32, %arg1: i32) -> (i32, i32) {
    %c0_i32 = arith.constant 0 : i32
    %c0_i32_0 = arith.constant 0 : i32
    %c0_i32_1 = arith.constant 0 : i32
    return %c0_i32, %c0_i32_0 : i32, i32
  }
  func.func @transform_8(%arg0: i32, %arg1: i32) -> (i32, i32) {
    %c0_i32 = arith.constant 0 : i32
    %c0_i32_0 = arith.constant 0 : i32
    %c0_i32_1 = arith.constant 0 : i32
    return %c0_i32, %c0_i32_0 : i32, i32
  }
  func.func @transform_9(%arg0: i32, %arg1: i32) -> (i32, i32) {
    %c0_i32 = arith.constant 0 : i32
    %c0_i32_0 = arith.constant 0 : i32
    %c0_i32_1 = arith.constant 0 : i32
    return %c0_i32, %c0_i32_0 : i32, i32
  }
  func.func @transform_10(%arg0: i32, %arg1: i32) -> (i32, i32) {
    %c0_i32 = arith.constant 0 : i32
    %c0_i32_0 = arith.constant 0 : i32
    %c0_i32_1 = arith.constant 0 : i32
    return %c0_i32, %c0_i32_0 : i32, i32
  }
  func.func @transform_11(%arg0: i32, %arg1: i32) -> (i32, i32) {
    %c0_i32 = arith.constant 0 : i32
    %c0_i32_0 = arith.constant 0 : i32
    %c0_i32_1 = arith.constant 0 : i32
    return %c0_i32, %c0_i32_0 : i32, i32
  }
  func.func @transform_12(%arg0: i32, %arg1: i32) -> (i32, i32, i32) {
    %c0_i32 = arith.constant 0 : i32
    %c0_i32_0 = arith.constant 0 : i32
    return %arg0, %arg1, %c0_i32 : i32, i32, i32
  }
}

</mosaic_0001>

<llo_original>
// kernel: tpu_custom_call.1
$region0: #{tpu_custom_call.1}
  #allocation0 [shape = 'u32[]', space=smem, size = 0x4, offset = 0x4, fixed_abs, tag = 'smem constant byte address 0x4 - core index']
  #allocation1 [shape = 'u32[144,128]{1,0:T(1,128)}', space=vmem, size = 0x12000, scoped, tag = 'internal scratch']
  #allocation2 [shape = 'bf16[8,32]{1,0:T(8,128)(2,1)}', space=vmem, size = 0x800, scoped, tag = 'scratch operand']
  #allocation3 [shape = 'bf16[4,8,8]{2,1,0:T(8,128)(2,1)}', space=vmem, size = 0x2000, scoped, tag = 'scratch operand']
  #allocation4 [shape = 'bf16[4,8,8]{2,1,0:T(8,128)(2,1)}', space=vmem, size = 0x2000, scoped, tag = 'scratch operand']
  %s0 = inlined_call_operand.vmem [shape: f32[2,8,32], index: 0, kind: input, shape index: {}]
  %s1 = inlined_call_operand.vmem [shape: f32[1,32], index: 1, kind: input, shape index: {}]
  %s2 = inlined_call_operand.vmem [shape: f32[1,32], index: 2, kind: input, shape index: {}]
  %s3 = inlined_call_operand.vmem [shape: bf16[32,96], index: 3, kind: input, shape index: {}]
  %s4 = inlined_call_operand.vmem [shape: bf16[32,32], index: 4, kind: input, shape index: {}]
  %s5 = inlined_call_operand.vmem [shape: f32[1,32], index: 5, kind: input, shape index: {}]
  %s6 = inlined_call_operand.vmem [shape: f32[1,32], index: 6, kind: input, shape index: {}]
  %s7 = inlined_call_operand.vmem [shape: f32[1,32], index: 7, kind: input, shape index: {}]
  %s8 = inlined_call_operand.vmem [shape: bf16[32,128], index: 8, kind: input, shape index: {}]
  %s9 = inlined_call_operand.vmem [shape: f32[1,128], index: 9, kind: input, shape index: {}]
  %s10 = inlined_call_operand.vmem [shape: bf16[128,32], index: 10, kind: input, shape index: {}]
  %s11 = inlined_call_operand.vmem [shape: f32[1,32], index: 11, kind: input, shape index: {}]
  %s12 = inlined_call_operand.hbm [shape: f32[2,8,32], index: 12, kind: output, shape index: {}]
  %s13 = sld [smem:[#allocation0]]
  $region85: #{tpu_custom_call.1} parent=0
    _
  %s15 = ssub.s32 1, %s13
  %s16 = scalar_select 0, %s15, %s13
  $region1: #{tpu_custom_call.1} parent=0
    #allocation5 [shape = 'u8[8192]{0}', space=vmem, size = 0x2000, scoped, tag = 'output window, operand 0']
    #allocation6 [shape = 's32[2]{0}', space=sflag, size = 0x8, scoped, tag = 'scoped memory for tpu_custom_call.1']
    %17 = vsyncpa [#allocation6], 0
    %s18 = scalar_lea.sflag [#allocation6], 1
    %19 = vsyncpa %s18, 0
    loop: start=0, step=1, limit=4
    $region2: #{tpu_custom_call.1} parent=1 // loop_pre_header
      _
    $region3: #{tpu_custom_call.1} parent=1 // loop_header
      %s21 = sphi 0, %s25
      %p22 = scmp.ge.s32.totalorder %s21, 4
      %s28 = sphi 0, %s40
      %s29 = sphi 0, %s36
      %s30 = sphi 0, %s28
      %s31 = sphi 0, %s29
      %s32 = sphi 0, %s30
      %s33 = sphi 0, %s31
      %s43 = sphi 0, %s45
      %s46 = sphi 0, %s43
      %s47 = sphi 0, %s46
      %s63 = sphi 0, %s47
      %s67 = sphi 0, %s67
      %s69 = sphi 0, %s67
      %s70 = sphi 0, %s69
      %s84 = sphi 0, %s70
      %s88 = sphi 0, %s88
      %s90 = sphi 0, %s88
      %s91 = sphi 0, %s90
      %s105 = sphi 0, %s91
      %s109 = sphi 0, %s109
      %s111 = sphi 0, %s109
      %s112 = sphi 0, %s111
      %s126 = sphi 0, %s112
      %s130 = sphi 0, %s130
      %s132 = sphi 0, %s130
      %s133 = sphi 0, %s132
      %s147 = sphi 0, %s133
      %s151 = sphi 0, %s151
      %s153 = sphi 0, %s151
      %s154 = sphi 0, %s153
      %s168 = sphi 0, %s154
      %s172 = sphi 0, %s172
      %s174 = sphi 0, %s172
      %s175 = sphi 0, %s174
      %s189 = sphi 0, %s175
      %s193 = sphi 0, %s193
      %s195 = sphi 0, %s193
      %s196 = sphi 0, %s195
      %s210 = sphi 0, %s196
      %s214 = sphi 0, %s214
      %s216 = sphi 0, %s214
      %s217 = sphi 0, %s216
      %s231 = sphi 0, %s217
      %s235 = sphi 0, %s235
      %s237 = sphi 0, %s235
      %s238 = sphi 0, %s237
      %s252 = sphi 0, %s238
      %s256 = sphi 0, %s256
      %s258 = sphi 0, %s256
      %s259 = sphi 0, %s258
      %s273 = sphi 0, %s259
      %s277 = sphi 0, %s277
      %s279 = sphi 0, %s277
      %s280 = sphi 0, %s279
      %s294 = sphi 0, %s280
      %s302 = sphi 0, %s304
      %s305 = sphi 0, %s302
      %s306 = sphi 0, %s305
      %s322 = sphi 0, %s306
    $region4: #{tpu_custom_call.1} parent=1 // loop_header_branch
      %24 = sbr.rel (%p22) target = $region8
    $region5: #{tpu_custom_call.1} parent=1 // loop_body
      %s26 = ssub.s32 %s21, 1
      %s27 = ssub.s32 %s21, 2
      %s34 = sadd.s32 1, %s29
      %p35 = scmp.ge.s32.totalorder %s34, 1
      %s36 = scalar_select %p35, 0, %s34
      %s37 = sadd.s32 1, %s28
      %s38 = scalar_select %p35, %s37, %s28
      %p39 = scmp.ge.s32.totalorder %s38, 2
      %s40 = scalar_select %p39, 0, %s38
      %s41 = ssub.s32 %s28, %s40
      %p42 = scmp.eq.s32.totalorder %s41, 0
      %s44 = sadd.s32 %s43, 1
      %s45 = scalar_select %p42, %s43, %s44
      %p48 = pneg %p42
      %p49 = scmp.eq.s32.totalorder %s21, 1
      %p50 = por %p48, %p49
      %p51 = scmp.ne.s32.totalorder %s43, %s46
      %p52 = scmp.eq.s32.totalorder %s21, 0
      %p53 = por %p51, %p52
      %p54 = scmp.ne.s32.totalorder %s43, %s46
      %p55 = scmp.eq.s32.totalorder %s26, 1
      %p56 = por %p54, %p55
      %p57 = scmp.ne.s32.totalorder %s46, %s47
      %p58 = scmp.eq.s32.totalorder %s26, 0
      %p59 = por %p57, %p58
      %p60 = scmp.ne.s32.totalorder %s46, %s47
      %p61 = scmp.eq.s32.totalorder %s27, 1
      %p62 = por %p60, %p61
      %p64 = scmp.ne.s32.totalorder %s47, %s63
      %p65 = scmp.eq.s32.totalorder %s27, 0
      %p66 = por %p64, %p65
      %s68 = sadd.s32 %s67, 1
      %p71 = scmp.eq.s32.totalorder %s21, 1
      %p72 = scmp.ne.s32.totalorder %s67, %s69
      %p73 = scmp.eq.s32.totalorder %s21, 0
      %p74 = por %p72, %p73
      %p75 = scmp.ne.s32.totalorder %s67, %s69
      %p76 = scmp.eq.s32.totalorder %s26, 1
      %p77 = por %p75, %p76
      %p78 = scmp.ne.s32.totalorder %s69, %s70
      %p79 = scmp.eq.s32.totalorder %s26, 0
      %p80 = por %p78, %p79
      %p81 = scmp.ne.s32.totalorder %s69, %s70
      %p82 = scmp.eq.s32.totalorder %s27, 1
      %p83 = por %p81, %p82
      %p85 = scmp.ne.s32.totalorder %s70, %s84
      %p86 = scmp.eq.s32.totalorder %s27, 0
      %p87 = por %p85, %p86
      %s89 = sadd.s32 %s88, 1
      %p92 = scmp.eq.s32.totalorder %s21, 1
      %p93 = scmp.ne.s32.totalorder %s88, %s90
      %p94 = scmp.eq.s32.totalorder %s21, 0
      %p95 = por %p93, %p94
      %p96 = scmp.ne.s32.totalorder %s88, %s90
      %p97 = scmp.eq.s32.totalorder %s26, 1
      %p98 = por %p96, %p97
      %p99 = scmp.ne.s32.totalorder %s90, %s91
      %p100 = scmp.eq.s32.totalorder %s26, 0
      %p101 = por %p99, %p100
      %p102 = scmp.ne.s32.totalorder %s90, %s91
      %p103 = scmp.eq.s32.totalorder %s27, 1
      %p104 = por %p102, %p103
      %p106 = scmp.ne.s32.totalorder %s91, %s105
      %p107 = scmp.eq.s32.totalorder %s27, 0
      %p108 = por %p106, %p107
      %s110 = sadd.s32 %s109, 1
      %p113 = scmp.eq.s32.totalorder %s21, 1
      %p114 = scmp.ne.s32.totalorder %s109, %s111
      %p115 = scmp.eq.s32.totalorder %s21, 0
      %p116 = por %p114, %p115
      %p117 = scmp.ne.s32.totalorder %s109, %s111
      %p118 = scmp.eq.s32.totalorder %s26, 1
      %p119 = por %p117, %p118
      %p120 = scmp.ne.s32.totalorder %s111, %s112
      %p121 = scmp.eq.s32.totalorder %s26, 0
      %p122 = por %p120, %p121
      %p123 = scmp.ne.s32.totalorder %s111, %s112
      %p124 = scmp.eq.s32.totalorder %s27, 1
      %p125 = por %p123, %p124
      %p127 = scmp.ne.s32.totalorder %s112, %s126
      %p128 = scmp.eq.s32.totalorder %s27, 0
      %p129 = por %p127, %p128
      %s131 = sadd.s32 %s130, 1
      %p134 = scmp.eq.s32.totalorder %s21, 1
      %p135 = scmp.ne.s32.totalorder %s130, %s132
      %p136 = scmp.eq.s32.totalorder %s21, 0
      %p137 = por %p135, %p136
      %p138 = scmp.ne.s32.totalorder %s130, %s132
      %p139 = scmp.eq.s32.totalorder %s26, 1
      %p140 = por %p138, %p139
      %p141 = scmp.ne.s32.totalorder %s132, %s133
      %p142 = scmp.eq.s32.totalorder %s26, 0
      %p143 = por %p141, %p142
      %p144 = scmp.ne.s32.totalorder %s132, %s133
      %p145 = scmp.eq.s32.totalorder %s27, 1
      %p146 = por %p144, %p145
      %p148 = scmp.ne.s32.totalorder %s133, %s147
      %p149 = scmp.eq.s32.totalorder %s27, 0
      %p150 = por %p148, %p149
      %s152 = sadd.s32 %s151, 1
      %p155 = scmp.eq.s32.totalorder %s21, 1
      %p156 = scmp.ne.s32.totalorder %s151, %s153
      %p157 = scmp.eq.s32.totalorder %s21, 0
      %p158 = por %p156, %p157
      %p159 = scmp.ne.s32.totalorder %s151, %s153
      %p160 = scmp.eq.s32.totalorder %s26, 1
      %p161 = por %p159, %p160
      %p162 = scmp.ne.s32.totalorder %s153, %s154
      %p163 = scmp.eq.s32.totalorder %s26, 0
      %p164 = por %p162, %p163
      %p165 = scmp.ne.s32.totalorder %s153, %s154
      %p166 = scmp.eq.s32.totalorder %s27, 1
      %p167 = por %p165, %p166
      %p169 = scmp.ne.s32.totalorder %s154, %s168
      %p170 = scmp.eq.s32.totalorder %s27, 0
      %p171 = por %p169, %p170
      %s173 = sadd.s32 %s172, 1
      %p176 = scmp.eq.s32.totalorder %s21, 1
      %p177 = scmp.ne.s32.totalorder %s172, %s174
      %p178 = scmp.eq.s32.totalorder %s21, 0
      %p179 = por %p177, %p178
      %p180 = scmp.ne.s32.totalorder %s172, %s174
      %p181 = scmp.eq.s32.totalorder %s26, 1
      %p182 = por %p180, %p181
      %p183 = scmp.ne.s32.totalorder %s174, %s175
      %p184 = scmp.eq.s32.totalorder %s26, 0
      %p185 = por %p183, %p184
      %p186 = scmp.ne.s32.totalorder %s174, %s175
      %p187 = scmp.eq.s32.totalorder %s27, 1
      %p188 = por %p186, %p187
      %p190 = scmp.ne.s32.totalorder %s175, %s189
      %p191 = scmp.eq.s32.totalorder %s27, 0
      %p192 = por %p190, %p191
      %s194 = sadd.s32 %s193, 1
      %p197 = scmp.eq.s32.totalorder %s21, 1
      %p198 = scmp.ne.s32.totalorder %s193, %s195
      %p199 = scmp.eq.s32.totalorder %s21, 0
      %p200 = por %p198, %p199
      %p201 = scmp.ne.s32.totalorder %s193, %s195
      %p202 = scmp.eq.s32.totalorder %s26, 1
      %p203 = por %p201, %p202
      %p204 = scmp.ne.s32.totalorder %s195, %s196
      %p205 = scmp.eq.s32.totalorder %s26, 0
      %p206 = por %p204, %p205
      %p207 = scmp.ne.s32.totalorder %s195, %s196
      %p208 = scmp.eq.s32.totalorder %s27, 1
      %p209 = por %p207, %p208
      %p211 = scmp.ne.s32.totalorder %s196, %s210
      %p212 = scmp.eq.s32.totalorder %s27, 0
      %p213 = por %p211, %p212
      %s215 = sadd.s32 %s214, 1
      %p218 = scmp.eq.s32.totalorder %s21, 1
      %p219 = scmp.ne.s32.totalorder %s214, %s216
      %p220 = scmp.eq.s32.totalorder %s21, 0
      %p221 = por %p219, %p220
      %p222 = scmp.ne.s32.totalorder %s214, %s216
      %p223 = scmp.eq.s32.totalorder %s26, 1
      %p224 = por %p222, %p223
      %p225 = scmp.ne.s32.totalorder %s216, %s217
      %p226 = scmp.eq.s32.totalorder %s26, 0
      %p227 = por %p225, %p226
      %p228 = scmp.ne.s32.totalorder %s216, %s217
      %p229 = scmp.eq.s32.totalorder %s27, 1
      %p230 = por %p228, %p229
      %p232 = scmp.ne.s32.totalorder %s217, %s231
      %p233 = scmp.eq.s32.totalorder %s27, 0
      %p234 = por %p232, %p233
      %s236 = sadd.s32 %s235, 1
      %p239 = scmp.eq.s32.totalorder %s21, 1
      %p240 = scmp.ne.s32.totalorder %s235, %s237
      %p241 = scmp.eq.s32.totalorder %s21, 0
      %p242 = por %p240, %p241
      %p243 = scmp.ne.s32.totalorder %s235, %s237
      %p244 = scmp.eq.s32.totalorder %s26, 1
      %p245 = por %p243, %p244
      %p246 = scmp.ne.s32.totalorder %s237, %s238
      %p247 = scmp.eq.s32.totalorder %s26, 0
      %p248 = por %p246, %p247
      %p249 = scmp.ne.s32.totalorder %s237, %s238
      %p250 = scmp.eq.s32.totalorder %s27, 1
      %p251 = por %p249, %p250
      %p253 = scmp.ne.s32.totalorder %s238, %s252
      %p254 = scmp.eq.s32.totalorder %s27, 0
      %p255 = por %p253, %p254
      %s257 = sadd.s32 %s256, 1
      %p260 = scmp.eq.s32.totalorder %s21, 1
      %p261 = scmp.ne.s32.totalorder %s256, %s258
      %p262 = scmp.eq.s32.totalorder %s21, 0
      %p263 = por %p261, %p262
      %p264 = scmp.ne.s32.totalorder %s256, %s258
      %p265 = scmp.eq.s32.totalorder %s26, 1
      %p266 = por %p264, %p265
      %p267 = scmp.ne.s32.totalorder %s258, %s259
      %p268 = scmp.eq.s32.totalorder %s26, 0
      %p269 = por %p267, %p268
      %p270 = scmp.ne.s32.totalorder %s258, %s259
      %p271 = scmp.eq.s32.totalorder %s27, 1
      %p272 = por %p270, %p271
      %p274 = scmp.ne.s32.totalorder %s259, %s273
      %p275 = scmp.eq.s32.totalorder %s27, 0
      %p276 = por %p274, %p275
      %s278 = sadd.s32 %s277, 1
      %p281 = scmp.eq.s32.totalorder %s21, 1
      %p282 = scmp.ne.s32.totalorder %s277, %s279
      %p283 = scmp.eq.s32.totalorder %s21, 0
      %p284 = por %p282, %p283
      %p285 = scmp.ne.s32.totalorder %s277, %s279
      %p286 = scmp.eq.s32.totalorder %s26, 1
      %p287 = por %p285, %p286
      %p288 = scmp.ne.s32.totalorder %s279, %s280
      %p289 = scmp.eq.s32.totalorder %s26, 0
      %p290 = por %p288, %p289
      %p291 = scmp.ne.s32.totalorder %s279, %s280
      %p292 = scmp.eq.s32.totalorder %s27, 1
      %p293 = por %p291, %p292
      %p295 = scmp.ne.s32.totalorder %s280, %s294
      %p296 = scmp.eq.s32.totalorder %s27, 0
      %p297 = por %p295, %p296
      %s298 = ssub.s32 %s28, %s40
      %s299 = ssub.s32 %s29, %s36
      %s300 = sor.u32 %s298, %s299
      %p301 = scmp.eq.s32.totalorder %s300, 0
      %s303 = sadd.s32 %s302, 1
      %s304 = scalar_select %p301, %s302, %s303
      %p307 = pneg %p301
      %p308 = scmp.eq.s32.totalorder %s21, 1
      %p309 = por %p307, %p308
      %p310 = scmp.ne.s32.totalorder %s302, %s305
      %p311 = scmp.eq.s32.totalorder %s21, 0
      %p312 = por %p310, %p311
      %p313 = scmp.ne.s32.totalorder %s302, %s305
      %p314 = scmp.eq.s32.totalorder %s26, 1
      %p315 = por %p313, %p314
      %p316 = scmp.ne.s32.totalorder %s305, %s306
      %p317 = scmp.eq.s32.totalorder %s26, 0
      %p318 = por %p316, %p317
      %p319 = scmp.ne.s32.totalorder %s305, %s306
      %p320 = scmp.eq.s32.totalorder %s27, 1
      %p321 = por %p319, %p320
      %p323 = scmp.ne.s32.totalorder %s306, %s322
      %p324 = scmp.eq.s32.totalorder %s27, 0
      %p325 = por %p323, %p324
      %p326 = scmp.le.s32.totalorder 1, %s21
      %p327 = scmp.lt.s32.totalorder %s21, 3
      %p328 = pnand %p326, %p327
      %p329 = pneg %p328
      // Predicated region
      $region9: #{tpu_custom_call.1} parent=5 // pred_check
        _
      $region10: #{tpu_custom_call.1} parent=5 // pred_check_branch
        %331 = sbr.rel (%p328) target = $region12
      $region11: #{tpu_custom_call.1} parent=5 // pred_region
        %s332 = ssub.s32 %s21, 1
        // Predicated region
        $region13: #{tpu_custom_call.1} parent=11 // pred_check
          %p333 = pneg %p59
        $region14: #{tpu_custom_call.1} parent=11 // pred_check_branch
          %335 = sbr.rel (%p333) target = $region16
        $region15: #{tpu_custom_call.1} parent=11 // pred_region
          %p336 = scmp.lt.s32.totalorder %s30, 1
          %s337 = scalar_select %p336, %s30, 1
          %s338 = smul.addr %s337, 8
          %s339 = scalar_lea.vmem %s0, %s338
        $region16: #{tpu_custom_call.1} parent=11 // pred_fallthru
          _
        // Predicated region
        $region17: #{tpu_custom_call.1} parent=11 // pred_check
          %p340 = pneg %p80
        $region18: #{tpu_custom_call.1} parent=11 // pred_check_branch
          %342 = sbr.rel (%p340) target = $region20
        $region19: #{tpu_custom_call.1} parent=11 // pred_region
          _
        $region20: #{tpu_custom_call.1} parent=11 // pred_fallthru
          _
        // Predicated region
        $region21: #{tpu_custom_call.1} parent=11 // pred_check
          %p343 = pneg %p101
        $region22: #{tpu_custom_call.1} parent=11 // pred_check_branch
          %345 = sbr.rel (%p343) target = $region24
        $region23: #{tpu_custom_call.1} parent=11 // pred_region
          _
        $region24: #{tpu_custom_call.1} parent=11 // pred_fallthru
          _
        // Predicated region
        $region25: #{tpu_custom_call.1} parent=11 // pred_check
          %p346 = pneg %p122
        $region26: #{tpu_custom_call.1} parent=11 // pred_check_branch
          %348 = sbr.rel (%p346) target = $region28
        $region27: #{tpu_custom_call.1} parent=11 // pred_region
          _
        $region28: #{tpu_custom_call.1} parent=11 // pred_fallthru
          _
        // Predicated region
        $region29: #{tpu_custom_call.1} parent=11 // pred_check
          %p349 = pneg %p143
        $region30: #{tpu_custom_call.1} parent=11 // pred_check_branch
          %351 = sbr.rel (%p349) target = $region32
        $region31: #{tpu_custom_call.1} parent=11 // pred_region
          _
        $region32: #{tpu_custom_call.1} parent=11 // pred_fallthru
          _
        // Predicated region
        $region33: #{tpu_custom_call.1} parent=11 // pred_check
          %p352 = pneg %p164
        $region34: #{tpu_custom_call.1} parent=11 // pred_check_branch
          %354 = sbr.rel (%p352) target = $region36
        $region35: #{tpu_custom_call.1} parent=11 // pred_region
          _
        $region36: #{tpu_custom_call.1} parent=11 // pred_fallthru
          _
        // Predicated region
        $region37: #{tpu_custom_call.1} parent=11 // pred_check
          %p355 = pneg %p185
        $region38: #{tpu_custom_call.1} parent=11 // pred_check_branch
          %357 = sbr.rel (%p355) target = $region40
        $region39: #{tpu_custom_call.1} parent=11 // pred_region
          _
        $region40: #{tpu_custom_call.1} parent=11 // pred_fallthru
          _
        // Predicated region
        $region41: #{tpu_custom_call.1} parent=11 // pred_check
          %p358 = pneg %p206
        $region42: #{tpu_custom_call.1} parent=11 // pred_check_branch
          %360 = sbr.rel (%p358) target = $region44
        $region43: #{tpu_custom_call.1} parent=11 // pred_region
          _
        $region44: #{tpu_custom_call.1} parent=11 // pred_fallthru
          _
        // Predicated region
        $region45: #{tpu_custom_call.1} parent=11 // pred_check
          %p361 = pneg %p227
        $region46: #{tpu_custom_call.1} parent=11 // pred_check_branch
          %363 = sbr.rel (%p361) target = $region48
        $region47: #{tpu_custom_call.1} parent=11 // pred_region
          _
        $region48: #{tpu_custom_call.1} parent=11 // pred_fallthru
          _
        // Predicated region
        $region49: #{tpu_custom_call.1} parent=11 // pred_check
          %p364 = pneg %p248
        $region50: #{tpu_custom_call.1} parent=11 // pred_check_branch
          %366 = sbr.rel (%p364) target = $region52
        $region51: #{tpu_custom_call.1} parent=11 // pred_region
          _
        $region52: #{tpu_custom_call.1} parent=11 // pred_fallthru
          _
        // Predicated region
        $region53: #{tpu_custom_call.1} parent=11 // pred_check
          %p367 = pneg %p269
        $region54: #{tpu_custom_call.1} parent=11 // pred_check_branch
          %369 = sbr.rel (%p367) target = $region56
        $region55: #{tpu_custom_call.1} parent=11 // pred_region
          _
        $region56: #{tpu_custom_call.1} parent=11 // pred_fallthru
          _
        // Predicated region
        $region57: #{tpu_custom_call.1} parent=11 // pred_check
          %p370 = pneg %p290
        $region58: #{tpu_custom_call.1} parent=11 // pred_check_branch
          %372 = sbr.rel (%p370) target = $region60
        $region59: #{tpu_custom_call.1} parent=11 // pred_region
          _
        $region60: #{tpu_custom_call.1} parent=11 // pred_fallthru
          _
      $region12: #{tpu_custom_call.1} parent=5 // pred_fallthru
        _
      %p373 = scmp.lt.s32.totalorder %s21, 2
      // Predicated region
      $region61: #{tpu_custom_call.1} parent=5 // pred_check
        %p374 = pneg %p373
      $region62: #{tpu_custom_call.1} parent=5 // pred_check_branch
        %376 = sbr.rel (%p374) target = $region64
      $region63: #{tpu_custom_call.1} parent=5 // pred_region
        _
      $region64: #{tpu_custom_call.1} parent=5 // pred_fallthru
        _
      %p377 = scmp.le.s32.totalorder 1, %s21
      %p378 = scmp.lt.s32.totalorder %s21, 3
      %p379 = pnand %p377, %p378
      %p380 = pneg %p379
      // Predicated region
      $region65: #{tpu_custom_call.1} parent=5 // pred_check
        _
      $region66: #{tpu_custom_call.1} parent=5 // pred_check_branch
        %382 = sbr.rel (%p379) target = $region68
      $region67: #{tpu_custom_call.1} parent=5 // pred_region
        %s383 = ssub.s32 %s21, 1
        %p384 = scmp.lt.s32.totalorder %s30, 1
        %s385 = scalar_select %p384, %s30, 1
        %s386 = smul.addr %s385, 8
        %s387 = scalar_lea.vmem %s0, %s386
        %p388 = pneg %p59
        %p389 = pneg %p56
        %p390 = pneg %p80
        %p391 = pneg %p77
        %p392 = pneg %p101
        %p393 = pneg %p98
        %p394 = pneg %p122
        %p395 = pneg %p119
        %p396 = pneg %p143
        %p397 = pneg %p140
        %p398 = pneg %p164
        %p399 = pneg %p161
        %p400 = pneg %p185
        %p401 = pneg %p182
        %p402 = pneg %p206
        %p403 = pneg %p203
        %p404 = pneg %p227
        %p405 = pneg %p224
        %p406 = pneg %p248
        %p407 = pneg %p245
        %p408 = pneg %p269
        %p409 = pneg %p266
        %p410 = pneg %p290
        %p411 = pneg %p287
        %p412 = pneg %p318
        %p413 = pneg %p315
        %s414 = sand.u32 %s305, 1
        %s415 = scalar_lea.sflag [#allocation6], %s414
        %s416 = sand.u32 %s305, 1
        %s417 = smul.addr %s416, 8
        %s418 = scalar_lea.vmem [#allocation5], %s417
        %p419 = scmp.lt.s32.totalorder %s30, 1
        %s420 = scalar_select %p419, %s30, 1
        %s421 = smul.addr %s420, 8
        %s422 = scalar_lea.vmem %s0, %s421
        %p424 = scmp.eq.s32.totalorder %s31, 0
        // Predicated region
        $region69: #{tpu_custom_call.1} parent=67 // pred_check
          %p425 = pneg %p424
        $region70: #{tpu_custom_call.1} parent=67 // pred_check_branch
          %427 = sbr.rel (%p425) target = $region72
        $region71: #{tpu_custom_call.1} parent=67 // pred_region
          %v428 = vld [vmem:[%s422] sm:$0xff]
          %v429 = vld [vmem:[%s1] sm:$0x1]
          %v430 = vld [vmem:[%s2] sm:$0x1]
          %vm431 = vcmask 261120
          %v432 = vsel %vm431, %v428, 0.0
          %433 = vadd.xlane.f32.xlu0 %v432
          %v434 = vpop.xlane.xlu0 %433
          %v435 = vrcp.pop 32.0
          %v436 = vmul.f32 %v434, %v435
          %v437 = vsub.f32 %v428, %v436
          %v438 = vmul.f32 %v437, %v437
          %v439 = vsel %vm431, %v438, 0.0
          %440 = vadd.xlane.f32.xlu0 %v439
          %v441 = vpop.xlane.xlu0 %440
          %v442 = vmul.f32 %v441, %v435
          %v443 = vadd.f32 %v442, 1e-05
          %v444 = vrsqrt.pop %v443
          %v445 = vmul.f32 %v437, %v444
          %v447 = vlaneseq
          %v448 = vshrl.u32 %v447, 7
          %v449 = vsub.s32 0, %v448
          %v450 = vrot.slane %v429, %v449
          %v452 = vmul.f32 %v445, %v450
          %v454 = vlaneseq
          %v455 = vshrl.u32 %v454, 7
          %v456 = vsub.s32 0, %v455
          %v457 = vrot.slane %v430, %v456
          %v459 = vadd.f32 %v452, %v457
          %v460 = vpack.c.bf16 %v459, %v459
          %vm461 = vcmask 257024
          %462 = vst.msk [vmem:[#allocation2] sm:$0xf] %vm461, %v460
          %v463 = vld [vmem:[%s3] sm:$0xf]
          %v464 = vld [vmem:[%s3 + $0x4] sm:$0xf]
          %v465 = vld [vmem:[%s3 + $0x8] sm:$0xf]
          %v466 = vld [vmem:[%s3 + $0xc] sm:$0xf]
          %v471 = vunpack.c.l.b16 %v463
          %v472 = vunpack.c.l.b16 %v464
          %v473 = vunpack.c.l.b16 %v465
          %v474 = vunpack.c.l.b16 %v466
          %v475 = vpack.c.b16 %v472, %v471
          %v476 = vpack.c.b16 %v474, %v473
          %477 = vrot.lane.b32.xlu0 %v475, 96
          %v478 = vpop.permute.xlu0 %477
          %479 = vrot.lane.b32.xlu0 %v476, 96
          %v480 = vpop.permute.xlu0 %479
          %v484 = vsel %vm431, %v460, 0
          %486 = vmatprep.subr.bf16.mxu0 0
          %487 = vmatpush1.bf16.msra.mxu0 %v478
          %488 = vmatprep.subr.bf16.mxu0 0
          %489 = vmatpush1.bf16.msra.mxu0 %v480
          %490 = vmatprep.subr.bf16.mxu0 0
          %491 = vmatpush1.bf16.msra.mxu0 0
          %492 = vmatprep.subr.bf16.mxu0 0
          %493 = vmatpush1.bf16.msra.mxu0 0
          %494 = vmatprep.subr.bf16.mxu0 0
          %495 = vmatpush1.bf16.msra.mxu0 0
          %496 = vmatprep.subr.bf16.mxu0 0
          %497 = vmatpush1.bf16.msra.mxu0 0
          %498 = vmatprep.subr.bf16.mxu0 0
          %499 = vmatpush1.bf16.msra.mxu0 0
          %500 = vmatprep.subr.bf16.mxu0 0
          %501 = vmatpush1.bf16.msra.mxu0 0
          %502 = vmatprep.subr.bf16.mxu0 0
          %503 = vmatpush1.bf16.msra.mxu0 0
          %504 = vmatprep.subr.bf16.mxu0 0
          %505 = vmatpush1.bf16.msra.mxu0 0
          %506 = vmatprep.subr.bf16.mxu0 0
          %507 = vmatpush1.bf16.msra.mxu0 0
          %508 = vmatprep.subr.bf16.mxu0 0
          %509 = vmatpush1.bf16.msra.mxu0 0
          %510 = vmatprep.subr.bf16.mxu0 0
          %511 = vmatpush1.bf16.msra.mxu0 0
          %512 = vmatprep.subr.bf16.mxu0 0
          %513 = vmatpush1.bf16.msra.mxu0 0
          %514 = vmatprep.subr.bf16.mxu0 0
          %515 = vmatpush1.bf16.msra.mxu0 0
          %516 = vmatprep.subr.bf16.mxu0 0
          %517 = vmatpush1.bf16.msra.mxu0 0
          %518 = vmatprep.mubr.bf16.mxu0 0
          %519 = vmatmul.mubr.bf16.gmra.mrb[0].mxu0 %v484
          %v520 = vpop.f32.mrb[0].mxu0
          %v521 = vadd.f32 0.0, %v520
          %v522 = vpop.f32.mrb[0].mxu0
          %v523 = vpop.f32.mrb[0].mxu0
          %v524 = vpop.f32.mrb[0].mxu0
          %525 = vdwg.mxu0
          %526 = vrot.lane.b32.xlu0 %v475, 64
          %v527 = vpop.permute.xlu0 %526
          %528 = vrot.lane.b32.xlu0 %v476, 64
          %v529 = vpop.permute.xlu0 %528
          %532 = vmatprep.subr.bf16.mxu0 0
          %533 = vmatpush1.bf16.msra.mxu0 %v527
          %534 = vmatprep.subr.bf16.mxu0 0
          %535 = vmatpush1.bf16.msra.mxu0 %v529
          %536 = vmatprep.subr.bf16.mxu0 0
          %537 = vmatpush1.bf16.msra.mxu0 0
          %538 = vmatprep.subr.bf16.mxu0 0
          %539 = vmatpush1.bf16.msra.mxu0 0
          %540 = vmatprep.subr.bf16.mxu0 0
          %541 = vmatpush1.bf16.msra.mxu0 0
          %542 = vmatprep.subr.bf16.mxu0 0
          %543 = vmatpush1.bf16.msra.mxu0 0
          %544 = vmatprep.subr.bf16.mxu0 0
          %545 = vmatpush1.bf16.msra.mxu0 0
          %546 = vmatprep.subr.bf16.mxu0 0
          %547 = vmatpush1.bf16.msra.mxu0 0
          %548 = vmatprep.subr.bf16.mxu0 0
          %549 = vmatpush1.bf16.msra.mxu0 0
          %550 = vmatprep.subr.bf16.mxu0 0
          %551 = vmatpush1.bf16.msra.mxu0 0
          %552 = vmatprep.subr.bf16.mxu0 0
          %553 = vmatpush1.bf16.msra.mxu0 0
          %554 = vmatprep.subr.bf16.mxu0 0
          %555 = vmatpush1.bf16.msra.mxu0 0
          %556 = vmatprep.subr.bf16.mxu0 0
          %557 = vmatpush1.bf16.msra.mxu0 0
          %558 = vmatprep.subr.bf16.mxu0 0
          %559 = vmatpush1.bf16.msra.mxu0 0
          %560 = vmatprep.subr.bf16.mxu0 0
          %561 = vmatpush1.bf16.msra.mxu0 0
          %562 = vmatprep.subr.bf16.mxu0 0
          %563 = vmatpush1.bf16.msra.mxu0 0
          %564 = vmatprep.mubr.bf16.mxu0 0
          %565 = vmatmul.mubr.bf16.gmra.mrb[0].mxu0 %v484
          %v566 = vpop.f32.mrb[0].mxu0
          %v567 = vadd.f32 0.0, %v566
          %v568 = vpop.f32.mrb[0].mxu0
          %v569 = vpop.f32.mrb[0].mxu0
          %v570 = vpop.f32.mrb[0].mxu0
          %571 = vdwg.mxu0
          %573 = vrot.lane.b32.xlu0 %v521, 120
          %v574 = vpop.permute.xlu0 %573
          %576 = vrot.lane.b32.xlu0 %v521, 112
          %v577 = vpop.permute.xlu0 %576
          %579 = vrot.lane.b32.xlu0 %v521, 104
          %v580 = vpop.permute.xlu0 %579
          %v582 = vcombine.low %v521, %v577
          %v583 = vcombine.high %v521, %v577
          %v585 = vunpack.c.l.s4 1983009808
          %v586 = vunpack.c.0.s8 %v585
          %v587 = vlaneseq
          %v588 = vshrl.u32 %v587, 7
          %v589 = vsub.s32 %v586, %v588
          %v590 = vrot.slane %v582, %v589
          %v592 = vunpack.c.l.s4 1983009808
          %v593 = vunpack.c.0.s8 %v592
          %v594 = vlaneseq
          %v595 = vshrl.u32 %v594, 7
          %v596 = vsub.s32 %v593, %v595
          %v597 = vrot.slane %v583, %v596
          %v598 = vcombine.low %v574, %v580
          %v599 = vcombine.high %v574, %v580
          %v601 = vunpack.c.l.s4 1983009808
          %v602 = vunpack.c.0.s8 %v601
          %v603 = vlaneseq
          %v604 = vshrl.u32 %v603, 7
          %v605 = vsub.s32 %v602, %v604
          %v606 = vrot.slane %v598, %v605
          %v608 = vunpack.c.l.s4 1983009808
          %v609 = vunpack.c.0.s8 %v608
          %v610 = vlaneseq
          %v611 = vshrl.u32 %v610, 7
          %v612 = vsub.s32 %v609, %v611
          %v613 = vrot.slane %v599, %v612
          %v614 = vcombine.low %v590, %v606
          %v615 = vcombine.high %v590, %v606
          %v617 = vunpack.c.l.s4 1934713408
          %v618 = vunpack.c.0.s8 %v617
          %v619 = vlaneseq
          %v620 = vshrl.u32 %v619, 7
          %v621 = vsub.s32 %v618, %v620
          %v622 = vrot.slane %v614, %v621
          %v624 = vunpack.c.l.s4 1934713408
          %v625 = vunpack.c.0.s8 %v624
          %v626 = vlaneseq
          %v627 = vshrl.u32 %v626, 7
          %v628 = vsub.s32 %v625, %v627
          %v629 = vrot.slane %v615, %v628
          %v630 = vcombine.low %v597, %v613
          %v631 = vcombine.high %v597, %v613
          %v633 = vunpack.c.l.s4 1934713408
          %v634 = vunpack.c.0.s8 %v633
          %v635 = vlaneseq
          %v636 = vshrl.u32 %v635, 7
          %v637 = vsub.s32 %v634, %v636
          %v638 = vrot.slane %v630, %v637
          %v640 = vunpack.c.l.s4 1934713408
          %v641 = vunpack.c.0.s8 %v640
          %v642 = vlaneseq
          %v643 = vshrl.u32 %v642, 7
          %v644 = vsub.s32 %v641, %v643
          %v645 = vrot.slane %v631, %v644
          %v646 = vcombine.high %v622, 0.0
          %v647 = vcombine.high %v629, 0.0
          %v648 = vcombine.high %v638, 0.0
          %v649 = vcombine.high %v645, 0.0
          %v650 = vcombine.low %v622, %v629
          %v652 = vunpack.c.l.s4 1983009808
          %v653 = vunpack.c.0.s8 %v652
          %v654 = vlaneseq
          %v655 = vshrl.u32 %v654, 7
          %v656 = vsub.s32 %v653, %v655
          %v657 = vrot.slane %v650, %v656
          %v658 = vcombine.low %v646, %v647
          %v660 = vunpack.c.l.s4 1983009808
          %v661 = vunpack.c.0.s8 %v660
          %v662 = vlaneseq
          %v663 = vshrl.u32 %v662, 7
          %v664 = vsub.s32 %v661, %v663
          %v665 = vrot.slane %v658, %v664
          %v666 = vcombine.low %v638, %v645
          %v668 = vunpack.c.l.s4 1983009808
          %v669 = vunpack.c.0.s8 %v668
          %v670 = vlaneseq
          %v671 = vshrl.u32 %v670, 7
          %v672 = vsub.s32 %v669, %v671
          %v673 = vrot.slane %v666, %v672
          %v674 = vcombine.low %v648, %v649
          %v676 = vunpack.c.l.s4 1983009808
          %v677 = vunpack.c.0.s8 %v676
          %v678 = vlaneseq
          %v679 = vshrl.u32 %v678, 7
          %v680 = vsub.s32 %v677, %v679
          %v681 = vrot.slane %v674, %v680
          %v682 = vcombine.low %v657, %v665
          %v683 = vcombine.high %v657, %v665
          %v685 = vunpack.c.l.s4 1934713408
          %v686 = vunpack.c.0.s8 %v685
          %v687 = vlaneseq
          %v688 = vshrl.u32 %v687, 7
          %v689 = vsub.s32 %v686, %v688
          %v690 = vrot.slane %v682, %v689
          %v692 = vunpack.c.l.s4 1934713408
          %v693 = vunpack.c.0.s8 %v692
          %v694 = vlaneseq
          %v695 = vshrl.u32 %v694, 7
          %v696 = vsub.s32 %v693, %v695
          %v697 = vrot.slane %v683, %v696
          %v698 = vcombine.low %v673, %v681
          %v699 = vcombine.high %v673, %v681
          %v701 = vunpack.c.l.s4 1934713408
          %v702 = vunpack.c.0.s8 %v701
          %v703 = vlaneseq
          %v704 = vshrl.u32 %v703, 7
          %v705 = vsub.s32 %v702, %v704
          %v706 = vrot.slane %v698, %v705
          %v708 = vunpack.c.l.s4 1934713408
          %v709 = vunpack.c.0.s8 %v708
          %v710 = vlaneseq
          %v711 = vshrl.u32 %v710, 7
          %v712 = vsub.s32 %v709, %v711
          %v713 = vrot.slane %v699, %v712
          %v714 = vcombine.low %v690, %v706
          %v715 = vcombine.high %v690, %v706
          %v716 = vcombine.low %v697, %v713
          %v717 = vcombine.high %v697, %v713
          %v718 = vpack.c.bf16 %v714, %v714
          %v719 = vpack.c.bf16 %v715, %v715
          %v720 = vpack.c.bf16 %v716, %v716
          %v721 = vpack.c.bf16 %v717, %v717
          %vm722 = vcmask 60416
          %723 = vst.msk [vmem:[#allocation3] sm:$0xf] %vm722, %v718
          %724 = vst.msk [vmem:[#allocation3 + $0x4] sm:$0xf] %vm722, %v719
          %725 = vst.msk [vmem:[#allocation3 + $0x8] sm:$0xf] %vm722, %v720
          %726 = vst.msk [vmem:[#allocation3 + $0xc] sm:$0xf] %vm722, %v721
          %728 = vrot.lane.b32.xlu0 %v567, 120
          %v729 = vpop.permute.xlu0 %728
          %731 = vrot.lane.b32.xlu0 %v567, 112
          %v732 = vpop.permute.xlu0 %731
          %734 = vrot.lane.b32.xlu0 %v567, 104
          %v735 = vpop.permute.xlu0 %734
          %v737 = vcombine.low %v567, %v732
          %v738 = vcombine.high %v567, %v732
          %v740 = vunpack.c.l.s4 1983009808
          %v741 = vunpack.c.0.s8 %v740
          %v742 = vlaneseq
          %v743 = vshrl.u32 %v742, 7
          %v744 = vsub.s32 %v741, %v743
          %v745 = vrot.slane %v737, %v744
          %v747 = vunpack.c.l.s4 1983009808
          %v748 = vunpack.c.0.s8 %v747
          %v749 = vlaneseq
          %v750 = vshrl.u32 %v749, 7
          %v751 = vsub.s32 %v748, %v750
          %v752 = vrot.slane %v738, %v751
          %v753 = vcombine.low %v729, %v735
          %v754 = vcombine.high %v729, %v735
          %v756 = vunpack.c.l.s4 1983009808
          %v757 = vunpack.c.0.s8 %v756
          %v758 = vlaneseq
          %v759 = vshrl.u32 %v758, 7
          %v760 = vsub.s32 %v757, %v759
          %v761 = vrot.slane %v753, %v760
          %v763 = vunpack.c.l.s4 1983009808
          %v764 = vunpack.c.0.s8 %v763
          %v765 = vlaneseq
          %v766 = vshrl.u32 %v765, 7
          %v767 = vsub.s32 %v764, %v766
          %v768 = vrot.slane %v754, %v767
          %v769 = vcombine.low %v745, %v761
          %v770 = vcombine.high %v745, %v761
          %v772 = vunpack.c.l.s4 1934713408
          %v773 = vunpack.c.0.s8 %v772
          %v774 = vlaneseq
          %v775 = vshrl.u32 %v774, 7
          %v776 = vsub.s32 %v773, %v775
          %v777 = vrot.slane %v769, %v776
          %v779 = vunpack.c.l.s4 1934713408
          %v780 = vunpack.c.0.s8 %v779
          %v781 = vlaneseq
          %v782 = vshrl.u32 %v781, 7
          %v783 = vsub.s32 %v780, %v782
          %v784 = vrot.slane %v770, %v783
          %v785 = vcombine.low %v752, %v768
          %v786 = vcombine.high %v752, %v768
          %v788 = vunpack.c.l.s4 1934713408
          %v789 = vunpack.c.0.s8 %v788
          %v790 = vlaneseq
          %v791 = vshrl.u32 %v790, 7
          %v792 = vsub.s32 %v789, %v791
          %v793 = vrot.slane %v785, %v792
          %v795 = vunpack.c.l.s4 1934713408
          %v796 = vunpack.c.0.s8 %v795
          %v797 = vlaneseq
          %v798 = vshrl.u32 %v797, 7
          %v799 = vsub.s32 %v796, %v798
          %v800 = vrot.slane %v786, %v799
          %v801 = vcombine.high %v777, 0.0
          %v802 = vcombine.high %v784, 0.0
          %v803 = vcombine.high %v793, 0.0
          %v804 = vcombine.high %v800, 0.0
          %v805 = vcombine.low %v777, %v784
          %v807 = vunpack.c.l.s4 1983009808
          %v808 = vunpack.c.0.s8 %v807
          %v809 = vlaneseq
          %v810 = vshrl.u32 %v809, 7
          %v811 = vsub.s32 %v808, %v810
          %v812 = vrot.slane %v805, %v811
          %v813 = vcombine.low %v801, %v802
          %v815 = vunpack.c.l.s4 1983009808
          %v816 = vunpack.c.0.s8 %v815
          %v817 = vlaneseq
          %v818 = vshrl.u32 %v817, 7
          %v819 = vsub.s32 %v816, %v818
          %v820 = vrot.slane %v813, %v819
          %v821 = vcombine.low %v793, %v800
          %v823 = vunpack.c.l.s4 1983009808
          %v824 = vunpack.c.0.s8 %v823
          %v825 = vlaneseq
          %v826 = vshrl.u32 %v825, 7
          %v827 = vsub.s32 %v824, %v826
          %v828 = vrot.slane %v821, %v827
          %v829 = vcombine.low %v803, %v804
          %v831 = vunpack.c.l.s4 1983009808
          %v832 = vunpack.c.0.s8 %v831
          %v833 = vlaneseq
          %v834 = vshrl.u32 %v833, 7
          %v835 = vsub.s32 %v832, %v834
          %v836 = vrot.slane %v829, %v835
          %v837 = vcombine.low %v812, %v820
          %v838 = vcombine.high %v812, %v820
          %v840 = vunpack.c.l.s4 1934713408
          %v841 = vunpack.c.0.s8 %v840
          %v842 = vlaneseq
          %v843 = vshrl.u32 %v842, 7
          %v844 = vsub.s32 %v841, %v843
          %v845 = vrot.slane %v837, %v844
          %v847 = vunpack.c.l.s4 1934713408
          %v848 = vunpack.c.0.s8 %v847
          %v849 = vlaneseq
          %v850 = vshrl.u32 %v849, 7
          %v851 = vsub.s32 %v848, %v850
          %v852 = vrot.slane %v838, %v851
          %v853 = vcombine.low %v828, %v836
          %v854 = vcombine.high %v828, %v836
          %v856 = vunpack.c.l.s4 1934713408
          %v857 = vunpack.c.0.s8 %v856
          %v858 = vlaneseq
          %v859 = vshrl.u32 %v858, 7
          %v860 = vsub.s32 %v857, %v859
          %v861 = vrot.slane %v853, %v860
          %v863 = vunpack.c.l.s4 1934713408
          %v864 = vunpack.c.0.s8 %v863
          %v865 = vlaneseq
          %v866 = vshrl.u32 %v865, 7
          %v867 = vsub.s32 %v864, %v866
          %v868 = vrot.slane %v854, %v867
          %v869 = vcombine.low %v845, %v861
          %v870 = vcombine.high %v845, %v861
          %v871 = vcombine.low %v852, %v868
          %v872 = vcombine.high %v852, %v868
          %v873 = vpack.c.bf16 %v869, %v869
          %v874 = vpack.c.bf16 %v870, %v870
          %v875 = vpack.c.bf16 %v871, %v871
          %v876 = vpack.c.bf16 %v872, %v872
          %877 = vst.msk [vmem:[#allocation4] sm:$0xf] %vm722, %v873
          %878 = vst.msk [vmem:[#allocation4 + $0x4] sm:$0xf] %vm722, %v874
          %879 = vst.msk [vmem:[#allocation4 + $0x8] sm:$0xf] %vm722, %v875
          %880 = vst.msk [vmem:[#allocation4 + $0xc] sm:$0xf] %vm722, %v876
        $region72: #{tpu_custom_call.1} parent=67 // pred_fallthru
          _
        %v881 = vld [vmem:[%s422] sm:$0xff]
        %v882 = vld [vmem:[#allocation2] sm:$0xf]
        %v883 = vld [vmem:[%s3] sm:$0xf]
        %v884 = vld [vmem:[%s3 + $0x4] sm:$0xf]
        %v885 = vld [vmem:[%s3 + $0x8] sm:$0xf]
        %v886 = vld [vmem:[%s3 + $0xc] sm:$0xf]
        %v891 = vunpack.c.l.b16 %v883
        %v892 = vunpack.c.l.b16 %v884
        %v893 = vunpack.c.l.b16 %v885
        %v894 = vunpack.c.l.b16 %v886
        %v895 = vpack.c.b16 %v892, %v891
        %v896 = vpack.c.b16 %v894, %v893
        %vm899 = vcmask 261120
        %v901 = vsel %vm899, %v882, 0
        %903 = vmatprep.subr.bf16.mxu0 0
        %904 = vmatpush1.bf16.msra.mxu0 %v895
        %905 = vmatprep.subr.bf16.mxu0 0
        %906 = vmatpush1.bf16.msra.mxu0 %v896
        %907 = vmatprep.subr.bf16.mxu0 0
        %908 = vmatpush1.bf16.msra.mxu0 0
        %909 = vmatprep.subr.bf16.mxu0 0
        %910 = vmatpush1.bf16.msra.mxu0 0
        %911 = vmatprep.subr.bf16.mxu0 0
        %912 = vmatpush1.bf16.msra.mxu0 0
        %913 = vmatprep.subr.bf16.mxu0 0
        %914 = vmatpush1.bf16.msra.mxu0 0
        %915 = vmatprep.subr.bf16.mxu0 0
        %916 = vmatpush1.bf16.msra.mxu0 0
        %917 = vmatprep.subr.bf16.mxu0 0
        %918 = vmatpush1.bf16.msra.mxu0 0
        %919 = vmatprep.subr.bf16.mxu0 0
        %920 = vmatpush1.bf16.msra.mxu0 0
        %921 = vmatprep.subr.bf16.mxu0 0
        %922 = vmatpush1.bf16.msra.mxu0 0
        %923 = vmatprep.subr.bf16.mxu0 0
        %924 = vmatpush1.bf16.msra.mxu0 0
        %925 = vmatprep.subr.bf16.mxu0 0
        %926 = vmatpush1.bf16.msra.mxu0 0
        %927 = vmatprep.subr.bf16.mxu0 0
        %928 = vmatpush1.bf16.msra.mxu0 0
        %929 = vmatprep.subr.bf16.mxu0 0
        %930 = vmatpush1.bf16.msra.mxu0 0
        %931 = vmatprep.subr.bf16.mxu0 0
        %932 = vmatpush1.bf16.msra.mxu0 0
        %933 = vmatprep.subr.bf16.mxu0 0
        %934 = vmatpush1.bf16.msra.mxu0 0
        %935 = vmatprep.mubr.bf16.mxu0 0
        %936 = vmatmul.mubr.bf16.gmra.mrb[0].mxu0 %v901
        %v937 = vpop.f32.mrb[0].mxu0
        %v938 = vadd.f32 0.0, %v937
        %v939 = vpop.f32.mrb[0].mxu0
        %v940 = vpop.f32.mrb[0].mxu0
        %v941 = vpop.f32.mrb[0].mxu0
        %942 = vdwg.mxu0
        %v943 = vmul.f32 %v938, 0.35355338
        %945 = vrot.lane.b32.xlu0 %v943, 120
        %v946 = vpop.permute.xlu0 %945
        %948 = vrot.lane.b32.xlu0 %v943, 112
        %v949 = vpop.permute.xlu0 %948
        %951 = vrot.lane.b32.xlu0 %v943, 104
        %v952 = vpop.permute.xlu0 %951
        %v954 = vcombine.low %v943, %v949
        %v955 = vcombine.high %v943, %v949
        %v957 = vunpack.c.l.s4 1983009808
        %v958 = vunpack.c.0.s8 %v957
        %v959 = vlaneseq
        %v960 = vshrl.u32 %v959, 7
        %v961 = vsub.s32 %v958, %v960
        %v962 = vrot.slane %v954, %v961
        %v964 = vunpack.c.l.s4 1983009808
        %v965 = vunpack.c.0.s8 %v964
        %v966 = vlaneseq
        %v967 = vshrl.u32 %v966, 7
        %v968 = vsub.s32 %v965, %v967
        %v969 = vrot.slane %v955, %v968
        %v970 = vcombine.low %v946, %v952
        %v971 = vcombine.high %v946, %v952
        %v973 = vunpack.c.l.s4 1983009808
        %v974 = vunpack.c.0.s8 %v973
        %v975 = vlaneseq
        %v976 = vshrl.u32 %v975, 7
        %v977 = vsub.s32 %v974, %v976
        %v978 = vrot.slane %v970, %v977
        %v980 = vunpack.c.l.s4 1983009808
        %v981 = vunpack.c.0.s8 %v980
        %v982 = vlaneseq
        %v983 = vshrl.u32 %v982, 7
        %v984 = vsub.s32 %v981, %v983
        %v985 = vrot.slane %v971, %v984
        %v986 = vcombine.low %v962, %v978
        %v987 = vcombine.high %v962, %v978
        %v989 = vunpack.c.l.s4 1934713408
        %v990 = vunpack.c.0.s8 %v989
        %v991 = vlaneseq
        %v992 = vshrl.u32 %v991, 7
        %v993 = vsub.s32 %v990, %v992
        %v994 = vrot.slane %v986, %v993
        %v996 = vunpack.c.l.s4 1934713408
        %v997 = vunpack.c.0.s8 %v996
        %v998 = vlaneseq
        %v999 = vshrl.u32 %v998, 7
        %v1000 = vsub.s32 %v997, %v999
        %v1001 = vrot.slane %v987, %v1000
        %v1002 = vcombine.low %v969, %v985
        %v1003 = vcombine.high %v969, %v985
        %v1005 = vunpack.c.l.s4 1934713408
        %v1006 = vunpack.c.0.s8 %v1005
        %v1007 = vlaneseq
        %v1008 = vshrl.u32 %v1007, 7
        %v1009 = vsub.s32 %v1006, %v1008
        %v1010 = vrot.slane %v1002, %v1009
        %v1012 = vunpack.c.l.s4 1934713408
        %v1013 = vunpack.c.0.s8 %v1012
        %v1014 = vlaneseq
        %v1015 = vshrl.u32 %v1014, 7
        %v1016 = vsub.s32 %v1013, %v1015
        %v1017 = vrot.slane %v1003, %v1016
        %v1018 = vcombine.high %v994, 0.0
        %v1019 = vcombine.high %v1001, 0.0
        %v1020 = vcombine.high %v1010, 0.0
        %v1021 = vcombine.high %v1017, 0.0
        %v1022 = vcombine.low %v994, %v1001
        %v1024 = vunpack.c.l.s4 1983009808
        %v1025 = vunpack.c.0.s8 %v1024
        %v1026 = vlaneseq
        %v1027 = vshrl.u32 %v1026, 7
        %v1028 = vsub.s32 %v1025, %v1027
        %v1029 = vrot.slane %v1022, %v1028
        %v1030 = vcombine.low %v1018, %v1019
        %v1032 = vunpack.c.l.s4 1983009808
        %v1033 = vunpack.c.0.s8 %v1032
        %v1034 = vlaneseq
        %v1035 = vshrl.u32 %v1034, 7
        %v1036 = vsub.s32 %v1033, %v1035
        %v1037 = vrot.slane %v1030, %v1036
        %v1038 = vcombine.low %v1010, %v1017
        %v1040 = vunpack.c.l.s4 1983009808
        %v1041 = vunpack.c.0.s8 %v1040
        %v1042 = vlaneseq
        %v1043 = vshrl.u32 %v1042, 7
        %v1044 = vsub.s32 %v1041, %v1043
        %v1045 = vrot.slane %v1038, %v1044
        %v1046 = vcombine.low %v1020, %v1021
        %v1048 = vunpack.c.l.s4 1983009808
        %v1049 = vunpack.c.0.s8 %v1048
        %v1050 = vlaneseq
        %v1051 = vshrl.u32 %v1050, 7
        %v1052 = vsub.s32 %v1049, %v1051
        %v1053 = vrot.slane %v1046, %v1052
        %v1054 = vcombine.low %v1029, %v1037
        %v1055 = vcombine.high %v1029, %v1037
        %v1057 = vunpack.c.l.s4 1934713408
        %v1058 = vunpack.c.0.s8 %v1057
        %v1059 = vlaneseq
        %v1060 = vshrl.u32 %v1059, 7
        %v1061 = vsub.s32 %v1058, %v1060
        %v1062 = vrot.slane %v1054, %v1061
        %v1064 = vunpack.c.l.s4 1934713408
        %v1065 = vunpack.c.0.s8 %v1064
        %v1066 = vlaneseq
        %v1067 = vshrl.u32 %v1066, 7
        %v1068 = vsub.s32 %v1065, %v1067
        %v1069 = vrot.slane %v1055, %v1068
        %v1070 = vcombine.low %v1045, %v1053
        %v1071 = vcombine.high %v1045, %v1053
        %v1073 = vunpack.c.l.s4 1934713408
        %v1074 = vunpack.c.0.s8 %v1073
        %v1075 = vlaneseq
        %v1076 = vshrl.u32 %v1075, 7
        %v1077 = vsub.s32 %v1074, %v1076
        %v1078 = vrot.slane %v1070, %v1077
        %v1080 = vunpack.c.l.s4 1934713408
        %v1081 = vunpack.c.0.s8 %v1080
        %v1082 = vlaneseq
        %v1083 = vshrl.u32 %v1082, 7
        %v1084 = vsub.s32 %v1081, %v1083
        %v1085 = vrot.slane %v1071, %v1084
        %v1086 = vcombine.low %v1062, %v1078
        %v1087 = vcombine.high %v1062, %v1078
        %v1088 = vcombine.low %v1069, %v1085
        %v1089 = vcombine.high %v1069, %v1085
        %v1090 = vpack.c.bf16 %v1086, %v1086
        %v1091 = vpack.c.bf16 %v1087, %v1087
        %v1092 = vpack.c.bf16 %v1088, %v1088
        %v1093 = vpack.c.bf16 %v1089, %v1089
        %v1094 = vld [vmem:[#allocation3] sm:$0xf]
        %v1095 = vld [vmem:[#allocation3 + $0x4] sm:$0xf]
        %v1096 = vld [vmem:[#allocation3 + $0x8] sm:$0xf]
        %v1097 = vld [vmem:[#allocation3 + $0xc] sm:$0xf]
        %vm1098 = vcmask 64512
        %v1100 = vsel %vm1098, %v1090, 0
        %v1103 = vsel %vm1098, %v1094, 0
        %1105 = vmatprep.subr.bf16.mxu0 0
        %1106 = vmatpush1.bf16.xpose.msra.mxu0 %v1103
        %1107 = vmatprep.subr.bf16.mxu0 0
        %1108 = vmatpush1.bf16.xpose.msra.mxu0 0
        %1109 = vmatprep.subr.bf16.mxu0 0
        %1110 = vmatpush1.bf16.xpose.msra.mxu0 0
        %1111 = vmatprep.subr.bf16.mxu0 0
        %1112 = vmatpush1.bf16.xpose.msra.mxu0 0
        %1113 = vmatprep.subr.bf16.mxu0 0
        %1114 = vmatpush1.bf16.xpose.msra.mxu0 0
        %1115 = vmatprep.subr.bf16.mxu0 0
        %1116 = vmatpush1.bf16.xpose.msra.mxu0 0
        %1117 = vmatprep.subr.bf16.mxu0 0
        %1118 = vmatpush1.bf16.xpose.msra.mxu0 0
        %1119 = vmatprep.subr.bf16.mxu0 0
        %1120 = vmatpush1.bf16.xpose.msra.mxu0 0
        %1121 = vmatprep.subr.bf16.mxu0 0
        %1122 = vmatpush1.bf16.xpose.msra.mxu0 0
        %1123 = vmatprep.subr.bf16.mxu0 0
        %1124 = vmatpush1.bf16.xpose.msra.mxu0 0
        %1125 = vmatprep.subr.bf16.mxu0 0
        %1126 = vmatpush1.bf16.xpose.msra.mxu0 0
        %1127 = vmatprep.subr.bf16.mxu0 0
        %1128 = vmatpush1.bf16.xpose.msra.mxu0 0
        %1129 = vmatprep.subr.bf16.mxu0 0
        %1130 = vmatpush1.bf16.xpose.msra.mxu0 0
        %1131 = vmatprep.subr.bf16.mxu0 0
        %1132 = vmatpush1.bf16.xpose.msra.mxu0 0
        %1133 = vmatprep.subr.bf16.mxu0 0
        %1134 = vmatpush1.bf16.xpose.msra.mxu0 0
        %1135 = vmatprep.subr.bf16.mxu0 0
        %1136 = vmatpush1.bf16.xpose.msra.mxu0 0
        %1137 = vmatprep.mubr.bf16.mxu0 0
        %1138 = vmatmul.mubr.bf16.gmra.mrb[0].mxu0 %v1100
        %v1139 = vpop.f32.mrb[0].mxu0
        %v1140 = vadd.f32 0.0, %v1139
        %v1141 = vpop.f32.mrb[0].mxu0
        %v1142 = vpop.f32.mrb[0].mxu0
        %v1143 = vpop.f32.mrb[0].mxu0
        %1144 = vdwg.mxu0
        %v1146 = vsel %vm1098, %v1091, 0
        %v1149 = vsel %vm1098, %v1095, 0
        %1151 = vmatprep.subr.bf16.mxu0 0
        %1152 = vmatpush1.bf16.xpose.msra.mxu0 %v1149
        %1153 = vmatprep.subr.bf16.mxu0 0
        %1154 = vmatpush1.bf16.xpose.msra.mxu0 0
        %1155 = vmatprep.subr.bf16.mxu0 0
        %1156 = vmatpush1.bf16.xpose.msra.mxu0 0
        %1157 = vmatprep.subr.bf16.mxu0 0
        %1158 = vmatpush1.bf16.xpose.msra.mxu0 0
        %1159 = vmatprep.subr.bf16.mxu0 0
        %1160 = vmatpush1.bf16.xpose.msra.mxu0 0
        %1161 = vmatprep.subr.bf16.mxu0 0
        %1162 = vmatpush1.bf16.xpose.msra.mxu0 0
        %1163 = vmatprep.subr.bf16.mxu0 0
        %1164 = vmatpush1.bf16.xpose.msra.mxu0 0
        %1165 = vmatprep.subr.bf16.mxu0 0
        %1166 = vmatpush1.bf16.xpose.msra.mxu0 0
        %1167 = vmatprep.subr.bf16.mxu0 0
        %1168 = vmatpush1.bf16.xpose.msra.mxu0 0
        %1169 = vmatprep.subr.bf16.mxu0 0
        %1170 = vmatpush1.bf16.xpose.msra.mxu0 0
        %1171 = vmatprep.subr.bf16.mxu0 0
        %1172 = vmatpush1.bf16.xpose.msra.mxu0 0
        %1173 = vmatprep.subr.bf16.mxu0 0
        %1174 = vmatpush1.bf16.xpose.msra.mxu0 0
        %1175 = vmatprep.subr.bf16.mxu0 0
        %1176 = vmatpush1.bf16.xpose.msra.mxu0 0
        %1177 = vmatprep.subr.bf16.mxu0 0
        %1178 = vmatpush1.bf16.xpose.msra.mxu0 0
        %1179 = vmatprep.subr.bf16.mxu0 0
        %1180 = vmatpush1.bf16.xpose.msra.mxu0 0
        %1181 = vmatprep.subr.bf16.mxu0 0
        %1182 = vmatpush1.bf16.xpose.msra.mxu0 0
        %1183 = vmatprep.mubr.bf16.mxu0 0
        %1184 = vmatmul.mubr.bf16.gmra.mrb[0].mxu0 %v1146
        %v1185 = vpop.f32.mrb[0].mxu0
        %v1186 = vadd.f32 0.0, %v1185
        %v1187 = vpop.f32.mrb[0].mxu0
        %v1188 = vpop.f32.mrb[0].mxu0
        %v1189 = vpop.f32.mrb[0].mxu0
        %1190 = vdwg.mxu0
        %v1192 = vsel %vm1098, %v1092, 0
        %v1195 = vsel %vm1098, %v1096, 0
        %1197 = vmatprep.subr.bf16.mxu0 0
        %1198 = vmatpush1.bf16.xpose.msra.mxu0 %v1195
        %1199 = vmatprep.subr.bf16.mxu0 0
        %1200 = vmatpush1.bf16.xpose.msra.mxu0 0
        %1201 = vmatprep.subr.bf16.mxu0 0
        %1202 = vmatpush1.bf16.xpose.msra.mxu0 0
        %1203 = vmatprep.subr.bf16.mxu0 0
        %1204 = vmatpush1.bf16.xpose.msra.mxu0 0
        %1205 = vmatprep.subr.bf16.mxu0 0
        %1206 = vmatpush1.bf16.xpose.msra.mxu0 0
        %1207 = vmatprep.subr.bf16.mxu0 0
        %1208 = vmatpush1.bf16.xpose.msra.mxu0 0
        %1209 = vmatprep.subr.bf16.mxu0 0
        %1210 = vmatpush1.bf16.xpose.msra.mxu0 0
        %1211 = vmatprep.subr.bf16.mxu0 0
        %1212 = vmatpush1.bf16.xpose.msra.mxu0 0
        %1213 = vmatprep.subr.bf16.mxu0 0
        %1214 = vmatpush1.bf16.xpose.msra.mxu0 0
        %1215 = vmatprep.subr.bf16.mxu0 0
        %1216 = vmatpush1.bf16.xpose.msra.mxu0 0
        %1217 = vmatprep.subr.bf16.mxu0 0
        %1218 = vmatpush1.bf16.xpose.msra.mxu0 0
        %1219 = vmatprep.subr.bf16.mxu0 0
        %1220 = vmatpush1.bf16.xpose.msra.mxu0 0
        %1221 = vmatprep.subr.bf16.mxu0 0
        %1222 = vmatpush1.bf16.xpose.msra.mxu0 0
        %1223 = vmatprep.subr.bf16.mxu0 0
        %1224 = vmatpush1.bf16.xpose.msra.mxu0 0
        %1225 = vmatprep.subr.bf16.mxu0 0
        %1226 = vmatpush1.bf16.xpose.msra.mxu0 0
        %1227 = vmatprep.subr.bf16.mxu0 0
        %1228 = vmatpush1.bf16.xpose.msra.mxu0 0
        %1229 = vmatprep.mubr.bf16.mxu0 0
        %1230 = vmatmul.mubr.bf16.gmra.mrb[0].mxu0 %v1192
        %v1231 = vpop.f32.mrb[0].mxu0
        %v1232 = vadd.f32 0.0, %v1231
        %v1233 = vpop.f32.mrb[0].mxu0
        %v1234 = vpop.f32.mrb[0].mxu0
        %v1235 = vpop.f32.mrb[0].mxu0
        %1236 = vdwg.mxu0
        %v1238 = vsel %vm1098, %v1093, 0
        %v1241 = vsel %vm1098, %v1097, 0
        %1243 = vmatprep.subr.bf16.mxu0 0
        %1244 = vmatpush1.bf16.xpose.msra.mxu0 %v1241
        %1245 = vmatprep.subr.bf16.mxu0 0
        %1246 = vmatpush1.bf16.xpose.msra.mxu0 0
        %1247 = vmatprep.subr.bf16.mxu0 0
        %1248 = vmatpush1.bf16.xpose.msra.mxu0 0
        %1249 = vmatprep.subr.bf16.mxu0 0
        %1250 = vmatpush1.bf16.xpose.msra.mxu0 0
        %1251 = vmatprep.subr.bf16.mxu0 0
        %1252 = vmatpush1.bf16.xpose.msra.mxu0 0
        %1253 = vmatprep.subr.bf16.mxu0 0
        %1254 = vmatpush1.bf16.xpose.msra.mxu0 0
        %1255 = vmatprep.subr.bf16.mxu0 0
        %1256 = vmatpush1.bf16.xpose.msra.mxu0 0
        %1257 = vmatprep.subr.bf16.mxu0 0
        %1258 = vmatpush1.bf16.xpose.msra.mxu0 0
        %1259 = vmatprep.subr.bf16.mxu0 0
        %1260 = vmatpush1.bf16.xpose.msra.mxu0 0
        %1261 = vmatprep.subr.bf16.mxu0 0
        %1262 = vmatpush1.bf16.xpose.msra.mxu0 0
        %1263 = vmatprep.subr.bf16.mxu0 0
        %1264 = vmatpush1.bf16.xpose.msra.mxu0 0
        %1265 = vmatprep.subr.bf16.mxu0 0
        %1266 = vmatpush1.bf16.xpose.msra.mxu0 0
        %1267 = vmatprep.subr.bf16.mxu0 0
        %1268 = vmatpush1.bf16.xpose.msra.mxu0 0
        %1269 = vmatprep.subr.bf16.mxu0 0
        %1270 = vmatpush1.bf16.xpose.msra.mxu0 0
        %1271 = vmatprep.subr.bf16.mxu0 0
        %1272 = vmatpush1.bf16.xpose.msra.mxu0 0
        %1273 = vmatprep.subr.bf16.mxu0 0
        %1274 = vmatpush1.bf16.xpose.msra.mxu0 0
        %1275 = vmatprep.mubr.bf16.mxu0 0
        %1276 = vmatmul.mubr.bf16.gmra.mrb[0].mxu0 %v1238
        %v1277 = vpop.f32.mrb[0].mxu0
        %v1278 = vadd.f32 0.0, %v1277
        %v1279 = vpop.f32.mrb[0].mxu0
        %v1280 = vpop.f32.mrb[0].mxu0
        %v1281 = vpop.f32.mrb[0].mxu0
        %1282 = vdwg.mxu0
        %v1283 = vsel %vm1098, %v1140, -inf
        %1284 = vmax.xlane.f32.xlu0 %v1283
        %v1285 = vpop.xlane.xlu0 %1284
        %v1286 = vsel %vm1098, %v1186, -inf
        %1287 = vmax.xlane.f32.xlu0 %v1286
        %v1288 = vpop.xlane.xlu0 %1287
        %v1289 = vsel %vm1098, %v1232, -inf
        %1290 = vmax.xlane.f32.xlu0 %v1289
        %v1291 = vpop.xlane.xlu0 %1290
        %v1292 = vsel %vm1098, %v1278, -inf
        %1293 = vmax.xlane.f32.xlu0 %v1292
        %v1294 = vpop.xlane.xlu0 %1293
        %v1295 = vsub.f32 %v1140, %v1285
        %v1296 = vsub.f32 %v1186, %v1288
        %v1297 = vsub.f32 %v1232, %v1291
        %v1298 = vsub.f32 %v1278, %v1294
        %v1299 = vmul.f32 %v1295, 1.442695
        %v1300 = vpow.pop %v1299
        %v1301 = vmul.f32 %v1296, 1.442695
        %v1302 = vpow.pop %v1301
        %v1303 = vmul.f32 %v1297, 1.442695
        %v1304 = vpow.pop %v1303
        %v1305 = vmul.f32 %v1298, 1.442695
        %v1306 = vpow.pop %v1305
        %v1307 = vsel %vm1098, %v1300, 0.0
        %1308 = vadd.xlane.f32.xlu0 %v1307
        %v1309 = vpop.xlane.xlu0 %1308
        %v1310 = vsel %vm1098, %v1302, 0.0
        %1311 = vadd.xlane.f32.xlu0 %v1310
        %v1312 = vpop.xlane.xlu0 %1311
        %v1313 = vsel %vm1098, %v1304, 0.0
        %1314 = vadd.xlane.f32.xlu0 %v1313
        %v1315 = vpop.xlane.xlu0 %1314
        %v1316 = vsel %vm1098, %v1306, 0.0
        %1317 = vadd.xlane.f32.xlu0 %v1316
        %v1318 = vpop.xlane.xlu0 %1317
        %v1319 = vpack.c.bf16 %v1300, %v1300
        %v1320 = vpack.c.bf16 %v1302, %v1302
        %v1321 = vpack.c.bf16 %v1304, %v1304
        %v1322 = vpack.c.bf16 %v1306, %v1306
        %v1323 = vld [vmem:[#allocation4] sm:$0xf]
        %v1324 = vld [vmem:[#allocation4 + $0x4] sm:$0xf]
        %v1325 = vld [vmem:[#allocation4 + $0x8] sm:$0xf]
        %v1326 = vld [vmem:[#allocation4 + $0xc] sm:$0xf]
        %v1328 = vsel %vm1098, %v1319, 0
        %vm1330 = vcmask 1043456
        %v1332 = vsel %vm1330, %v1323, 0
        %1334 = vmatprep.subr.bf16.mxu0 0
        %1335 = vmatpush1.bf16.msra.mxu0 %v1332
        %1336 = vmatprep.subr.bf16.mxu0 0
        %1337 = vmatpush1.bf16.msra.mxu0 0
        %1338 = vmatprep.subr.bf16.mxu0 0
        %1339 = vmatpush1.bf16.msra.mxu0 0
        %1340 = vmatprep.subr.bf16.mxu0 0
        %1341 = vmatpush1.bf16.msra.mxu0 0
        %1342 = vmatprep.subr.bf16.mxu0 0
        %1343 = vmatpush1.bf16.msra.mxu0 0
        %1344 = vmatprep.subr.bf16.mxu0 0
        %1345 = vmatpush1.bf16.msra.mxu0 0
        %1346 = vmatprep.subr.bf16.mxu0 0
        %1347 = vmatpush1.bf16.msra.mxu0 0
        %1348 = vmatprep.subr.bf16.mxu0 0
        %1349 = vmatpush1.bf16.msra.mxu0 0
        %1350 = vmatprep.subr.bf16.mxu0 0
        %1351 = vmatpush1.bf16.msra.mxu0 0
        %1352 = vmatprep.subr.bf16.mxu0 0
        %1353 = vmatpush1.bf16.msra.mxu0 0
        %1354 = vmatprep.subr.bf16.mxu0 0
        %1355 = vmatpush1.bf16.msra.mxu0 0
        %1356 = vmatprep.subr.bf16.mxu0 0
        %1357 = vmatpush1.bf16.msra.mxu0 0
        %1358 = vmatprep.subr.bf16.mxu0 0
        %1359 = vmatpush1.bf16.msra.mxu0 0
        %1360 = vmatprep.subr.bf16.mxu0 0
        %1361 = vmatpush1.bf16.msra.mxu0 0
        %1362 = vmatprep.subr.bf16.mxu0 0
        %1363 = vmatpush1.bf16.msra.mxu0 0
        %1364 = vmatprep.subr.bf16.mxu0 0
        %1365 = vmatpush1.bf16.msra.mxu0 0
        %1366 = vmatprep.mubr.bf16.mxu0 0
        %1367 = vmatmul.mubr.bf16.gmra.mrb[0].mxu0 %v1328
        %v1368 = vpop.f32.mrb[0].mxu0
        %v1369 = vadd.f32 0.0, %v1368
        %v1370 = vpop.f32.mrb[0].mxu0
        %v1371 = vpop.f32.mrb[0].mxu0
        %v1372 = vpop.f32.mrb[0].mxu0
        %1373 = vdwg.mxu0
        %v1375 = vsel %vm1098, %v1320, 0
        %v1378 = vsel %vm1330, %v1324, 0
        %1380 = vmatprep.subr.bf16.mxu0 0
        %1381 = vmatpush1.bf16.msra.mxu0 %v1378
        %1382 = vmatprep.subr.bf16.mxu0 0
        %1383 = vmatpush1.bf16.msra.mxu0 0
        %1384 = vmatprep.subr.bf16.mxu0 0
        %1385 = vmatpush1.bf16.msra.mxu0 0
        %1386 = vmatprep.subr.bf16.mxu0 0
        %1387 = vmatpush1.bf16.msra.mxu0 0
        %1388 = vmatprep.subr.bf16.mxu0 0
        %1389 = vmatpush1.bf16.msra.mxu0 0
        %1390 = vmatprep.subr.bf16.mxu0 0
        %1391 = vmatpush1.bf16.msra.mxu0 0
        %1392 = vmatprep.subr.bf16.mxu0 0
        %1393 = vmatpush1.bf16.msra.mxu0 0
        %1394 = vmatprep.subr.bf16.mxu0 0
        %1395 = vmatpush1.bf16.msra.mxu0 0
        %1396 = vmatprep.subr.bf16.mxu0 0
        %1397 = vmatpush1.bf16.msra.mxu0 0
        %1398 = vmatprep.subr.bf16.mxu0 0
        %1399 = vmatpush1.bf16.msra.mxu0 0
        %1400 = vmatprep.subr.bf16.mxu0 0
        %1401 = vmatpush1.bf16.msra.mxu0 0
        %1402 = vmatprep.subr.bf16.mxu0 0
        %1403 = vmatpush1.bf16.msra.mxu0 0
        %1404 = vmatprep.subr.bf16.mxu0 0
        %1405 = vmatpush1.bf16.msra.mxu0 0
        %1406 = vmatprep.subr.bf16.mxu0 0
        %1407 = vmatpush1.bf16.msra.mxu0 0
        %1408 = vmatprep.subr.bf16.mxu0 0
        %1409 = vmatpush1.bf16.msra.mxu0 0
        %1410 = vmatprep.subr.bf16.mxu0 0
        %1411 = vmatpush1.bf16.msra.mxu0 0
        %1412 = vmatprep.mubr.bf16.mxu0 0
        %1413 = vmatmul.mubr.bf16.gmra.mrb[0].mxu0 %v1375
        %v1414 = vpop.f32.mrb[0].mxu0
        %v1415 = vadd.f32 0.0, %v1414
        %v1416 = vpop.f32.mrb[0].mxu0
        %v1417 = vpop.f32.mrb[0].mxu0
        %v1418 = vpop.f32.mrb[0].mxu0
        %1419 = vdwg.mxu0
        %v1421 = vsel %vm1098, %v1321, 0
        %v1424 = vsel %vm1330, %v1325, 0
        %1426 = vmatprep.subr.bf16.mxu0 0
        %1427 = vmatpush1.bf16.msra.mxu0 %v1424
        %1428 = vmatprep.subr.bf16.mxu0 0
        %1429 = vmatpush1.bf16.msra.mxu0 0
        %1430 = vmatprep.subr.bf16.mxu0 0
        %1431 = vmatpush1.bf16.msra.mxu0 0
        %1432 = vmatprep.subr.bf16.mxu0 0
        %1433 = vmatpush1.bf16.msra.mxu0 0
        %1434 = vmatprep.subr.bf16.mxu0 0
        %1435 = vmatpush1.bf16.msra.mxu0 0
        %1436 = vmatprep.subr.bf16.mxu0 0
        %1437 = vmatpush1.bf16.msra.mxu0 0
        %1438 = vmatprep.subr.bf16.mxu0 0
        %1439 = vmatpush1.bf16.msra.mxu0 0
        %1440 = vmatprep.subr.bf16.mxu0 0
        %1441 = vmatpush1.bf16.msra.mxu0 0
        %1442 = vmatprep.subr.bf16.mxu0 0
        %1443 = vmatpush1.bf16.msra.mxu0 0
        %1444 = vmatprep.subr.bf16.mxu0 0
        %1445 = vmatpush1.bf16.msra.mxu0 0
        %1446 = vmatprep.subr.bf16.mxu0 0
        %1447 = vmatpush1.bf16.msra.mxu0 0
        %1448 = vmatprep.subr.bf16.mxu0 0
        %1449 = vmatpush1.bf16.msra.mxu0 0
        %1450 = vmatprep.subr.bf16.mxu0 0
        %1451 = vmatpush1.bf16.msra.mxu0 0
        %1452 = vmatprep.subr.bf16.mxu0 0
        %1453 = vmatpush1.bf16.msra.mxu0 0
        %1454 = vmatprep.subr.bf16.mxu0 0
        %1455 = vmatpush1.bf16.msra.mxu0 0
        %1456 = vmatprep.subr.bf16.mxu0 0
        %1457 = vmatpush1.bf16.msra.mxu0 0
        %1458 = vmatprep.mubr.bf16.mxu0 0
        %1459 = vmatmul.mubr.bf16.gmra.mrb[0].mxu0 %v1421
        %v1460 = vpop.f32.mrb[0].mxu0
        %v1461 = vadd.f32 0.0, %v1460
        %v1462 = vpop.f32.mrb[0].mxu0
        %v1463 = vpop.f32.mrb[0].mxu0
        %v1464 = vpop.f32.mrb[0].mxu0
        %1465 = vdwg.mxu0
        %v1467 = vsel %vm1098, %v1322, 0
        %v1470 = vsel %vm1330, %v1326, 0
        %1472 = vmatprep.subr.bf16.mxu0 0
        %1473 = vmatpush1.bf16.msra.mxu0 %v1470
        %1474 = vmatprep.subr.bf16.mxu0 0
        %1475 = vmatpush1.bf16.msra.mxu0 0
        %1476 = vmatprep.subr.bf16.mxu0 0
        %1477 = vmatpush1.bf16.msra.mxu0 0
        %1478 = vmatprep.subr.bf16.mxu0 0
        %1479 = vmatpush1.bf16.msra.mxu0 0
        %1480 = vmatprep.subr.bf16.mxu0 0
        %1481 = vmatpush1.bf16.msra.mxu0 0
        %1482 = vmatprep.subr.bf16.mxu0 0
        %1483 = vmatpush1.bf16.msra.mxu0 0
        %1484 = vmatprep.subr.bf16.mxu0 0
        %1485 = vmatpush1.bf16.msra.mxu0 0
        %1486 = vmatprep.subr.bf16.mxu0 0
        %1487 = vmatpush1.bf16.msra.mxu0 0
        %1488 = vmatprep.subr.bf16.mxu0 0
        %1489 = vmatpush1.bf16.msra.mxu0 0
        %1490 = vmatprep.subr.bf16.mxu0 0
        %1491 = vmatpush1.bf16.msra.mxu0 0
        %1492 = vmatprep.subr.bf16.mxu0 0
        %1493 = vmatpush1.bf16.msra.mxu0 0
        %1494 = vmatprep.subr.bf16.mxu0 0
        %1495 = vmatpush1.bf16.msra.mxu0 0
        %1496 = vmatprep.subr.bf16.mxu0 0
        %1497 = vmatpush1.bf16.msra.mxu0 0
        %1498 = vmatprep.subr.bf16.mxu0 0
        %1499 = vmatpush1.bf16.msra.mxu0 0
        %1500 = vmatprep.subr.bf16.mxu0 0
        %1501 = vmatpush1.bf16.msra.mxu0 0
        %1502 = vmatprep.subr.bf16.mxu0 0
        %1503 = vmatpush1.bf16.msra.mxu0 0
        %1504 = vmatprep.mubr.bf16.mxu0 0
        %1505 = vmatmul.mubr.bf16.gmra.mrb[0].mxu0 %v1467
        %v1506 = vpop.f32.mrb[0].mxu0
        %v1507 = vadd.f32 0.0, %v1506
        %v1508 = vpop.f32.mrb[0].mxu0
        %v1509 = vpop.f32.mrb[0].mxu0
        %v1510 = vpop.f32.mrb[0].mxu0
        %1511 = vdwg.mxu0
        %v1512 = vrcp.pop %v1309
        %v1513 = vmul.f32 %v1369, %v1512
        %v1514 = vrcp.pop %v1312
        %v1515 = vmul.f32 %v1415, %v1514
        %v1516 = vrcp.pop %v1315
        %v1517 = vmul.f32 %v1461, %v1516
        %v1518 = vrcp.pop %v1318
        %v1519 = vmul.f32 %v1507, %v1518
        %v1520 = vcombine.low %v1513, %v1517
        %v1521 = vcombine.high %v1513, %v1517
        %v1523 = vunpack.c.l.s4 1983009808
        %v1524 = vunpack.c.0.s8 %v1523
        %v1525 = vlaneseq
        %v1526 = vshrl.u32 %v1525, 7
        %v1527 = vsub.s32 %v1524, %v1526
        %v1528 = vrot.slane %v1520, %v1527
        %v1530 = vunpack.c.l.s4 1983009808
        %v1531 = vunpack.c.0.s8 %v1530
        %v1532 = vlaneseq
        %v1533 = vshrl.u32 %v1532, 7
        %v1534 = vsub.s32 %v1531, %v1533
        %v1535 = vrot.slane %v1521, %v1534
        %v1536 = vcombine.low %v1515, %v1519
        %v1537 = vcombine.high %v1515, %v1519
        %v1539 = vunpack.c.l.s4 1983009808
        %v1540 = vunpack.c.0.s8 %v1539
        %v1541 = vlaneseq
        %v1542 = vshrl.u32 %v1541, 7
        %v1543 = vsub.s32 %v1540, %v1542
        %v1544 = vrot.slane %v1536, %v1543
        %v1546 = vunpack.c.l.s4 1983009808
        %v1547 = vunpack.c.0.s8 %v1546
        %v1548 = vlaneseq
        %v1549 = vshrl.u32 %v1548, 7
        %v1550 = vsub.s32 %v1547, %v1549
        %v1551 = vrot.slane %v1537, %v1550
        %v1552 = vcombine.low %v1528, %v1544
        %v1553 = vcombine.high %v1528, %v1544
        %v1555 = vunpack.c.l.s4 1934713408
        %v1556 = vunpack.c.0.s8 %v1555
        %v1557 = vlaneseq
        %v1558 = vshrl.u32 %v1557, 7
        %v1559 = vsub.s32 %v1556, %v1558
        %v1560 = vrot.slane %v1552, %v1559
        %v1562 = vunpack.c.l.s4 1934713408
        %v1563 = vunpack.c.0.s8 %v1562
        %v1564 = vlaneseq
        %v1565 = vshrl.u32 %v1564, 7
        %v1566 = vsub.s32 %v1563, %v1565
        %v1567 = vrot.slane %v1553, %v1566
        %v1568 = vcombine.low %v1535, %v1551
        %v1569 = vcombine.high %v1535, %v1551
        %v1571 = vunpack.c.l.s4 1934713408
        %v1572 = vunpack.c.0.s8 %v1571
        %v1573 = vlaneseq
        %v1574 = vshrl.u32 %v1573, 7
        %v1575 = vsub.s32 %v1572, %v1574
        %v1576 = vrot.slane %v1568, %v1575
        %v1578 = vunpack.c.l.s4 1934713408
        %v1579 = vunpack.c.0.s8 %v1578
        %v1580 = vlaneseq
        %v1581 = vshrl.u32 %v1580, 7
        %v1582 = vsub.s32 %v1579, %v1581
        %v1583 = vrot.slane %v1569, %v1582
        %v1584 = vcombine.high %v1560, 0.0
        %v1585 = vcombine.high %v1567, 0.0
        %v1586 = vcombine.high %v1576, 0.0
        %v1587 = vcombine.high %v1583, 0.0
        %v1588 = vcombine.low %v1560, %v1567
        %v1590 = vunpack.c.l.s4 1983009808
        %v1591 = vunpack.c.0.s8 %v1590
        %v1592 = vlaneseq
        %v1593 = vshrl.u32 %v1592, 7
        %v1594 = vsub.s32 %v1591, %v1593
        %v1595 = vrot.slane %v1588, %v1594
        %v1596 = vcombine.low %v1584, %v1585
        %v1598 = vunpack.c.l.s4 1983009808
        %v1599 = vunpack.c.0.s8 %v1598
        %v1600 = vlaneseq
        %v1601 = vshrl.u32 %v1600, 7
        %v1602 = vsub.s32 %v1599, %v1601
        %v1603 = vrot.slane %v1596, %v1602
        %v1604 = vcombine.low %v1576, %v1583
        %v1606 = vunpack.c.l.s4 1983009808
        %v1607 = vunpack.c.0.s8 %v1606
        %v1608 = vlaneseq
        %v1609 = vshrl.u32 %v1608, 7
        %v1610 = vsub.s32 %v1607, %v1609
        %v1611 = vrot.slane %v1604, %v1610
        %v1612 = vcombine.low %v1586, %v1587
        %v1614 = vunpack.c.l.s4 1983009808
        %v1615 = vunpack.c.0.s8 %v1614
        %v1616 = vlaneseq
        %v1617 = vshrl.u32 %v1616, 7
        %v1618 = vsub.s32 %v1615, %v1617
        %v1619 = vrot.slane %v1612, %v1618
        %v1620 = vcombine.low %v1595, %v1603
        %v1621 = vcombine.high %v1595, %v1603
        %v1623 = vunpack.c.l.s4 1934713408
        %v1624 = vunpack.c.0.s8 %v1623
        %v1625 = vlaneseq
        %v1626 = vshrl.u32 %v1625, 7
        %v1627 = vsub.s32 %v1624, %v1626
        %v1628 = vrot.slane %v1620, %v1627
        %v1630 = vunpack.c.l.s4 1934713408
        %v1631 = vunpack.c.0.s8 %v1630
        %v1632 = vlaneseq
        %v1633 = vshrl.u32 %v1632, 7
        %v1634 = vsub.s32 %v1631, %v1633
        %v1635 = vrot.slane %v1621, %v1634
        %v1636 = vcombine.low %v1611, %v1619
        %v1637 = vcombine.high %v1611, %v1619
        %v1639 = vunpack.c.l.s4 1934713408
        %v1640 = vunpack.c.0.s8 %v1639
        %v1641 = vlaneseq
        %v1642 = vshrl.u32 %v1641, 7
        %v1643 = vsub.s32 %v1640, %v1642
        %v1644 = vrot.slane %v1636, %v1643
        %v1646 = vunpack.c.l.s4 1934713408
        %v1647 = vunpack.c.0.s8 %v1646
        %v1648 = vlaneseq
        %v1649 = vshrl.u32 %v1648, 7
        %v1650 = vsub.s32 %v1647, %v1649
        %v1651 = vrot.slane %v1637, %v1650
        %v1652 = vcombine.low %v1628, %v1644
        %v1653 = vcombine.high %v1628, %v1644
        %v1654 = vcombine.low %v1635, %v1651
        %v1655 = vcombine.high %v1635, %v1651
        %1657 = vrot.lane.b32.xlu0 %v1653, 8
        %v1658 = vpop.permute.xlu0 %1657
        %1661 = vrot.lane.b32.xlu0 %v1654, 16
        %v1662 = vpop.permute.xlu0 %1661
        %1665 = vrot.lane.b32.xlu0 %v1655, 24
        %v1666 = vpop.permute.xlu0 %1665
        %v1668 = vsel %vm1098, %v1652, %v1658
        %vm1669 = vcmask 130048
        %v1670 = vsel %vm1669, %v1668, %v1662
        %vm1671 = vcmask 195584
        %v1672 = vsel %vm1671, %v1670, %v1666
        %v1673 = vpack.c.bf16 %v1672, %v1672
        %v1674 = vld [vmem:[%s4] sm:$0xf]
        %v1675 = vld [vmem:[%s4 + $0x4] sm:$0xf]
        %v1676 = vld [vmem:[%s4 + $0x8] sm:$0xf]
        %v1677 = vld [vmem:[%s4 + $0xc] sm:$0xf]
        %v1678 = vld [vmem:[%s5] sm:$0x1]
        %v1680 = vlaneseq
        %v1681 = vshrl.u32 %v1680, 7
        %v1682 = vsub.s32 0, %v1681
        %v1683 = vrot.slane %v1678, %v1682
        %v1689 = vunpack.c.l.b16 %v1674
        %v1690 = vunpack.c.l.b16 %v1675
        %v1691 = vunpack.c.l.b16 %v1676
        %v1692 = vunpack.c.l.b16 %v1677
        %v1693 = vpack.c.b16 %v1690, %v1689
        %v1694 = vpack.c.b16 %v1692, %v1691
        %v1698 = vsel %vm899, %v1673, 0
        %1700 = vmatprep.subr.bf16.mxu0 0
        %1701 = vmatpush1.bf16.msra.mxu0 %v1693
        %1702 = vmatprep.subr.bf16.mxu0 0
        %1703 = vmatpush1.bf16.msra.mxu0 %v1694
        %1704 = vmatprep.subr.bf16.mxu0 0
        %1705 = vmatpush1.bf16.msra.mxu0 0
        %1706 = vmatprep.subr.bf16.mxu0 0
        %1707 = vmatpush1.bf16.msra.mxu0 0
        %1708 = vmatprep.subr.bf16.mxu0 0
        %1709 = vmatpush1.bf16.msra.mxu0 0
        %1710 = vmatprep.subr.bf16.mxu0 0
        %1711 = vmatpush1.bf16.msra.mxu0 0
        %1712 = vmatprep.subr.bf16.mxu0 0
        %1713 = vmatpush1.bf16.msra.mxu0 0
        %1714 = vmatprep.subr.bf16.mxu0 0
        %1715 = vmatpush1.bf16.msra.mxu0 0
        %1716 = vmatprep.subr.bf16.mxu0 0
        %1717 = vmatpush1.bf16.msra.mxu0 0
        %1718 = vmatprep.subr.bf16.mxu0 0
        %1719 = vmatpush1.bf16.msra.mxu0 0
        %1720 = vmatprep.subr.bf16.mxu0 0
        %1721 = vmatpush1.bf16.msra.mxu0 0
        %1722 = vmatprep.subr.bf16.mxu0 0
        %1723 = vmatpush1.bf16.msra.mxu0 0
        %1724 = vmatprep.subr.bf16.mxu0 0
        %1725 = vmatpush1.bf16.msra.mxu0 0
        %1726 = vmatprep.subr.bf16.mxu0 0
        %1727 = vmatpush1.bf16.msra.mxu0 0
        %1728 = vmatprep.subr.bf16.mxu0 0
        %1729 = vmatpush1.bf16.msra.mxu0 0
        %1730 = vmatprep.subr.bf16.mxu0 0
        %1731 = vmatpush1.bf16.msra.mxu0 0
        %1732 = vmatprep.mubr.bf16.mxu0 0
        %1733 = vmatmul.mubr.bf16.gmra.mrb[0].mxu0 %v1698
        %v1734 = vpop.f32.mrb[0].mxu0
        %v1735 = vadd.f32 %v1683, %v1734
        %v1736 = vpop.f32.mrb[0].mxu0
        %v1737 = vpop.f32.mrb[0].mxu0
        %v1738 = vpop.f32.mrb[0].mxu0
        %1739 = vdwg.mxu0
        %v1740 = vadd.f32 %v881, %v1735
        %v1741 = vld [vmem:[%s6] sm:$0x1]
        %v1742 = vld [vmem:[%s7] sm:$0x1]
        %v1743 = vsel %vm899, %v1740, 0.0
        %1744 = vadd.xlane.f32.xlu0 %v1743
        %v1745 = vpop.xlane.xlu0 %1744
        %v1746 = vrcp.pop 32.0
        %v1747 = vmul.f32 %v1745, %v1746
        %v1748 = vsub.f32 %v1740, %v1747
        %v1749 = vmul.f32 %v1748, %v1748
        %v1750 = vsel %vm899, %v1749, 0.0
        %1751 = vadd.xlane.f32.xlu0 %v1750
        %v1752 = vpop.xlane.xlu0 %1751
        %v1753 = vmul.f32 %v1752, %v1746
        %v1754 = vadd.f32 %v1753, 1e-05
        %v1755 = vrsqrt.pop %v1754
        %v1756 = vmul.f32 %v1748, %v1755
        %v1758 = vlaneseq
        %v1759 = vshrl.u32 %v1758, 7
        %v1760 = vsub.s32 0, %v1759
        %v1761 = vrot.slane %v1741, %v1760
        %v1763 = vmul.f32 %v1756, %v1761
        %v1765 = vlaneseq
        %v1766 = vshrl.u32 %v1765, 7
        %v1767 = vsub.s32 0, %v1766
        %v1768 = vrot.slane %v1742, %v1767
        %v1770 = vadd.f32 %v1763, %v1768
        %v1771 = vpack.c.bf16 %v1770, %v1770
        %v1772 = vld [vmem:[%s8] sm:$0xf]
        %v1773 = vld [vmem:[%s8 + $0x4] sm:$0xf]
        %v1774 = vld [vmem:[%s8 + $0x8] sm:$0xf]
        %v1775 = vld [vmem:[%s8 + $0xc] sm:$0xf]
        %v1776 = vld [vmem:[%s9] sm:$0x1]
        %v1778 = vlaneseq
        %v1779 = vshrl.u32 %v1778, 7
        %v1780 = vsub.s32 0, %v1779
        %v1781 = vrot.slane %v1776, %v1780
        %v1787 = vunpack.c.l.b16 %v1772
        %v1788 = vunpack.c.l.b16 %v1773
        %v1789 = vunpack.c.l.b16 %v1774
        %v1790 = vunpack.c.l.b16 %v1775
        %v1791 = vpack.c.b16 %v1788, %v1787
        %v1792 = vpack.c.b16 %v1790, %v1789
        %v1796 = vsel %vm899, %v1771, 0
        %1798 = vmatprep.subr.bf16.mxu0 0
        %1799 = vmatpush1.bf16.msra.mxu0 %v1791
        %1800 = vmatprep.subr.bf16.mxu0 0
        %1801 = vmatpush1.bf16.msra.mxu0 %v1792
        %1802 = vmatprep.subr.bf16.mxu0 0
        %1803 = vmatpush1.bf16.msra.mxu0 0
        %1804 = vmatprep.subr.bf16.mxu0 0
        %1805 = vmatpush1.bf16.msra.mxu0 0
        %1806 = vmatprep.subr.bf16.mxu0 0
        %1807 = vmatpush1.bf16.msra.mxu0 0
        %1808 = vmatprep.subr.bf16.mxu0 0
        %1809 = vmatpush1.bf16.msra.mxu0 0
        %1810 = vmatprep.subr.bf16.mxu0 0
        %1811 = vmatpush1.bf16.msra.mxu0 0
        %1812 = vmatprep.subr.bf16.mxu0 0
        %1813 = vmatpush1.bf16.msra.mxu0 0
        %1814 = vmatprep.subr.bf16.mxu0 0
        %1815 = vmatpush1.bf16.msra.mxu0 0
        %1816 = vmatprep.subr.bf16.mxu0 0
        %1817 = vmatpush1.bf16.msra.mxu0 0
        %1818 = vmatprep.subr.bf16.mxu0 0
        %1819 = vmatpush1.bf16.msra.mxu0 0
        %1820 = vmatprep.subr.bf16.mxu0 0
        %1821 = vmatpush1.bf16.msra.mxu0 0
        %1822 = vmatprep.subr.bf16.mxu0 0
        %1823 = vmatpush1.bf16.msra.mxu0 0
        %1824 = vmatprep.subr.bf16.mxu0 0
        %1825 = vmatpush1.bf16.msra.mxu0 0
        %1826 = vmatprep.subr.bf16.mxu0 0
        %1827 = vmatpush1.bf16.msra.mxu0 0
        %1828 = vmatprep.subr.bf16.mxu0 0
        %1829 = vmatpush1.bf16.msra.mxu0 0
        %1830 = vmatprep.mubr.bf16.mxu0 0
        %1831 = vmatmul.mubr.bf16.gmra.mrb[0].mxu0 %v1796
        %v1832 = vpop.f32.mrb[0].mxu0
        %v1833 = vadd.f32 %v1781, %v1832
        %v1834 = vpop.f32.mrb[0].mxu0
        %v1835 = vpop.f32.mrb[0].mxu0
        %v1836 = vpop.f32.mrb[0].mxu0
        %1837 = vdwg.mxu0
        %v1838 = vmul.f32 %v1833, 0.5
        %v1839 = vmul.f32 %v1833, 0.70710677
        %v1840 = verf.f32.pop %v1839
        %v1841 = vadd.f32 %v1840, 1.0
        %v1842 = vmul.f32 %v1838, %v1841
        %v1843 = vpack.c.bf16 %v1842, %v1842
        %v1844 = vld [vmem:[%s10] sm:$0xf]
        %v1845 = vld [vmem:[%s10 + $0x4] sm:$0xf]
        %v1846 = vld [vmem:[%s10 + $0x8] sm:$0xf]
        %v1847 = vld [vmem:[%s10 + $0xc] sm:$0xf]
        %v1848 = vld [vmem:[%s10 + $0x10] sm:$0xf]
        %v1849 = vld [vmem:[%s10 + $0x14] sm:$0xf]
        %v1850 = vld [vmem:[%s10 + $0x18] sm:$0xf]
        %v1851 = vld [vmem:[%s10 + $0x1c] sm:$0xf]
        %v1852 = vld [vmem:[%s10 + $0x20] sm:$0xf]
        %v1853 = vld [vmem:[%s10 + $0x24] sm:$0xf]
        %v1854 = vld [vmem:[%s10 + $0x28] sm:$0xf]
        %v1855 = vld [vmem:[%s10 + $0x2c] sm:$0xf]
        %v1856 = vld [vmem:[%s10 + $0x30] sm:$0xf]
        %v1857 = vld [vmem:[%s10 + $0x34] sm:$0xf]
        %v1858 = vld [vmem:[%s10 + $0x38] sm:$0xf]
        %v1859 = vld [vmem:[%s10 + $0x3c] sm:$0xf]
        %v1860 = vld [vmem:[%s11] sm:$0x1]
        %v1862 = vlaneseq
        %v1863 = vshrl.u32 %v1862, 7
        %v1864 = vsub.s32 0, %v1863
        %v1865 = vrot.slane %v1860, %v1864
        %v1883 = vunpack.c.l.b16 %v1844
        %v1884 = vunpack.c.l.b16 %v1845
        %v1885 = vunpack.c.l.b16 %v1846
        %v1886 = vunpack.c.l.b16 %v1847
        %v1887 = vunpack.c.l.b16 %v1848
        %v1888 = vunpack.c.l.b16 %v1849
        %v1889 = vunpack.c.l.b16 %v1850
        %v1890 = vunpack.c.l.b16 %v1851
        %v1891 = vunpack.c.l.b16 %v1852
        %v1892 = vunpack.c.l.b16 %v1853
        %v1893 = vunpack.c.l.b16 %v1854
        %v1894 = vunpack.c.l.b16 %v1855
        %v1895 = vunpack.c.l.b16 %v1856
        %v1896 = vunpack.c.l.b16 %v1857
        %v1897 = vunpack.c.l.b16 %v1858
        %v1898 = vunpack.c.l.b16 %v1859
        %v1899 = vpack.c.b16 %v1884, %v1883
        %v1900 = vpack.c.b16 %v1886, %v1885
        %v1901 = vpack.c.b16 %v1888, %v1887
        %v1902 = vpack.c.b16 %v1890, %v1889
        %v1903 = vpack.c.b16 %v1892, %v1891
        %v1904 = vpack.c.b16 %v1894, %v1893
        %v1905 = vpack.c.b16 %v1896, %v1895
        %v1906 = vpack.c.b16 %v1898, %v1897
        %1915 = vmatprep.subr.bf16.mxu0 0
        %1916 = vmatpush1.bf16.msra.mxu0 %v1899
        %1917 = vmatprep.subr.bf16.mxu0 0
        %1918 = vmatpush1.bf16.msra.mxu0 %v1900
        %1919 = vmatprep.subr.bf16.mxu0 0
        %1920 = vmatpush1.bf16.msra.mxu0 %v1901
        %1921 = vmatprep.subr.bf16.mxu0 0
        %1922 = vmatpush1.bf16.msra.mxu0 %v1902
        %1923 = vmatprep.subr.bf16.mxu0 0
        %1924 = vmatpush1.bf16.msra.mxu0 %v1903
        %1925 = vmatprep.subr.bf16.mxu0 0
        %1926 = vmatpush1.bf16.msra.mxu0 %v1904
        %1927 = vmatprep.subr.bf16.mxu0 0
        %1928 = vmatpush1.bf16.msra.mxu0 %v1905
        %1929 = vmatprep.subr.bf16.mxu0 0
        %1930 = vmatpush1.bf16.msra.mxu0 %v1906
        %1931 = vmatprep.subr.bf16.mxu0 0
        %1932 = vmatpush1.bf16.msra.mxu0 0
        %1933 = vmatprep.subr.bf16.mxu0 0
        %1934 = vmatpush1.bf16.msra.mxu0 0
        %1935 = vmatprep.subr.bf16.mxu0 0
        %1936 = vmatpush1.bf16.msra.mxu0 0
        %1937 = vmatprep.subr.bf16.mxu0 0
        %1938 = vmatpush1.bf16.msra.mxu0 0
        %1939 = vmatprep.subr.bf16.mxu0 0
        %1940 = vmatpush1.bf16.msra.mxu0 0
        %1941 = vmatprep.subr.bf16.mxu0 0
        %1942 = vmatpush1.bf16.msra.mxu0 0
        %1943 = vmatprep.subr.bf16.mxu0 0
        %1944 = vmatpush1.bf16.msra.mxu0 0
        %1945 = vmatprep.subr.bf16.mxu0 0
        %1946 = vmatpush1.bf16.msra.mxu0 0
        %1947 = vmatprep.mubr.bf16.mxu0 0
        %1948 = vmatmul.mubr.bf16.gmra.mrb[0].mxu0 %v1843
        %v1949 = vpop.f32.mrb[0].mxu0
        %v1950 = vadd.f32 %v1865, %v1949
        %v1951 = vpop.f32.mrb[0].mxu0
        %v1952 = vpop.f32.mrb[0].mxu0
        %v1953 = vpop.f32.mrb[0].mxu0
        %1954 = vdwg.mxu0
        %v1955 = vadd.f32 %v1740, %v1950
        %1956 = vst.msk [vmem:[%s418] sm:$0xff] %vm899, %v1955
        %s1957 = sand.u32 %s305, 1
        %s1958 = scalar_lea.sflag [#allocation6], %s1957
        %s1959 = sand.u32 %s305, 1
        %s1960 = smul.addr %s1959, 8
        %s1961 = scalar_lea.vmem [#allocation5], %s1960
        // Predicated region
        $region73: #{tpu_custom_call.1} parent=67 // pred_check
          %p1962 = pneg %p315
        $region74: #{tpu_custom_call.1} parent=67 // pred_check_branch
          %1964 = sbr.rel (%p1962) target = $region76
        $region75: #{tpu_custom_call.1} parent=67 // pred_region
          %s1966 = ssub.s32 128, 128
          %1967 = vsyncadd %s1958, %s1966
          %s1968 = sadd.s32 %s31, %s30
          %s1969 = smul.addr %s1968, 128
          %s1970 = scalar_lea.hbm %s12, %s1969
          %s1972 = sshll.u32 %s1961, 4
          %s1973 = int_to_ptr.vmem [resolvable:$true] %s1972
          %1975 = dma.vmem_to_hbm [thread:$0]  %s1973, 128, %s1970, %s1958
        $region76: #{tpu_custom_call.1} parent=67 // pred_fallthru
          _
      $region68: #{tpu_custom_call.1} parent=5 // pred_fallthru
        _
      %p1976 = scmp.le.s32.totalorder 2, %s21
      // Predicated region
      $region77: #{tpu_custom_call.1} parent=5 // pred_check
        %p1977 = pneg %p1976
      $region78: #{tpu_custom_call.1} parent=5 // pred_check_branch
        %1979 = sbr.rel (%p1977) target = $region80
      $region79: #{tpu_custom_call.1} parent=5 // pred_region
        %s1980 = ssub.s32 %s21, 2
        // Predicated region
        $region81: #{tpu_custom_call.1} parent=79 // pred_check
          %p1981 = pneg %p321
        $region82: #{tpu_custom_call.1} parent=79 // pred_check_branch
          %1983 = sbr.rel (%p1981) target = $region84
        $region83: #{tpu_custom_call.1} parent=79 // pred_region
          %s1984 = sand.u32 %s306, 1
          %s1985 = scalar_lea.sflag [#allocation6], %s1984
          %s1986 = sand.u32 %s306, 1
          %s1987 = smul.addr %s1986, 8
          %s1988 = scalar_lea.vmem [#allocation5], %s1987
          %1989 = dma.done %s1985, 128
        $region84: #{tpu_custom_call.1} parent=79 // pred_fallthru
          _
      $region80: #{tpu_custom_call.1} parent=5 // pred_fallthru
        _
    $region6: #{tpu_custom_call.1} parent=1 // loop_footer
      %s25 = sadd.s32 1, %s21
    $region7: #{tpu_custom_call.1} parent=1 // loop_footer_branch
      %20 = sbr.rel target = $region3
    $region8: #{tpu_custom_call.1} parent=1 // loop_exit
      _
    %1990 = vsyncpa [#allocation6], 1
    %s1991 = scalar_lea.sflag [#allocation6], 1
    %1992 = vsyncpa %s1991, 1

</llo_original>
